<compile_context>
chip_gen: v5e
topology: v5e:2x2
jax: 0.10.0
libtpu: 0.0.40
codegen_flags: <defaults>
</compile_context>

<pallas_src>
import jax
import jax.numpy as jnp
from jax import lax
from jax.experimental import pallas as pl
from jax.experimental.pallas import tpu as pltpu

_LANES = 128
_GROUP = 8  # sublane group size for dense stores


def _round_up(x: int, m: int) -> int:
    return (x + m - 1) // m * m


def _vmem_capacity_bytes() -> int:
    """Physical VMEM per core, with a conservative fallback (v7x = 64 MiB/TC)."""
    try:
        info = pltpu.get_tpu_info()
        cap = int(getattr(info, "vmem_capacity_bytes", 0))
        if cap > 0:
            return cap
    except Exception:
        pass
    return 64 << 20


def _num_core_splits() -> int:
    """2 on v7x (2 TensorCores/chip) so the cached path can use both cores."""
    try:
        kind = jax.devices()[0].device_kind.lower()
        if "v7" in kind or "7x" in kind:
            return 2
    except Exception:
        pass
    return 1


def _make_cached_table_kernel(tokens_per_step: int, blocks_per_core: int):
    """Whole (lane-padded) embedding table cached in VMEM; rows gathered via
    dynamic sublane slices, stored as dense 8-row groups."""
    n_groups = tokens_per_step // _GROUP

    def kernel(ids_ref, emb_hbm, out_ref, table_vmem, load_sem):
        core = pl.program_id(0)
        inner = pl.program_id(1)

        # One-time (per TensorCore) streaming copy of the full table into the
        # persistent VMEM scratch.  Guarded on the *inner* (sequential) index
        # so that when the leading "parallel" axis is sharded across cores
        # (v7x) each core fills its own scratch copy; on a single core with
        # split=1 it runs exactly once.
        # TODO(synk): hoist table residency across calls (cross-call VMEM
        # prefetch) so repeated lookups don't re-DMA the table every call.
        @pl.when(inner == 0)
        def _():
            cp = pltpu.make_async_copy(emb_hbm, table_vmem, load_sem.at[0])
            cp.start()
            cp.wait()

        base = (core * blocks_per_core + inner) * tokens_per_step

        def gather_group(g, carry):
            # 8 single-row VMEM gathers assembled in registers (XLU concat),
            # then one dense, unmasked 8-sublane x full-lane store — avoids
            # the 8x sublane-masked vst penalty of per-row stores.
            off = base + g * _GROUP
            rows = [table_vmem[pl.ds(ids_ref[off + r], 1), :]
                    for r in range(_GROUP)]
            start = pl.multiple_of(g * _GROUP, _GROUP)
            out_ref[pl.ds(start, _GROUP), :] = jnp.concatenate(rows, axis=0)
            return carry

        lax.fori_loop(0, n_groups, gather_group, 0,
                      unroll=max(1, min(2, n_groups)))

    return kernel


def _make_hbm_gather_kernel(tokens_per_step: int, window: int):
    """Table stays in HBM; keep `window` row-gather DMAs in flight, landing
    directly in the (T, dim) output block."""

    def kernel(ids_ref, emb_hbm, out_ref, dma_sems):
        base = pl.program_id(0) * tokens_per_step

        def start_row(t):
            row = ids_ref[base + t]                     # SMEM scalar read
            pltpu.make_async_copy(
                emb_hbm.at[row], out_ref.at[t],
                dma_sems.at[t & (window - 1)]).start()

        # Prime the window (static unroll; `window` is a small Python int).
        for t in range(window):
            start_row(t)

        def body(t, carry):
            # Launch the next row's DMA (and its SMEM id read) BEFORE waiting
            # on the current one: keeps the full window in flight and keeps
            # scalar reads ahead of the .wait() (which breaks sst->sld
            # forwarding in SMEM).
            @pl.when(t + window < tokens_per_step)
            def _():
                start_row(t + window)

            pltpu.make_async_copy(
                emb_hbm.at[0], out_ref.at[t],
                dma_sems.at[t & (window - 1)]).wait()
            return carry

        lax.fori_loop(0, tokens_per_step, body, 0)

    return kernel


def custom_embedding(input_ids, embedding_matrix, *,
                     max_tokens_per_step: int = 1024,
                     dma_window: int = 16,
                     force_path: str | None = None):
    """Equivalent of PyTorch `embedding_matrix[input_ids]`."""
    orig_shape = input_ids.shape
    vocab, dim = embedding_matrix.shape
    dtype = embedding_matrix.dtype
    itemsize = jnp.dtype(dtype).itemsize
    sublane = max(1, 32 // itemsize)

    flat_ids = input_ids.reshape(-1).astype(jnp.int32)
    n_tok = int(flat_ids.shape[0])

    dim_pad = _round_up(dim, _LANES)
    row_bytes = dim_pad * itemsize
    table_bytes = _round_up(vocab, sublane) * row_bytes
    gather_bytes = n_tok * row_bytes

    vmem_cap = _vmem_capacity_bytes()
    headroom = 6 << 20

    # Tokens per grid step: multiple of 8 sublanes, capped; for the cached
    # path, shrunk until table + double-buffered output fits physical VMEM.
    tps = min(_round_up(max_tokens_per_step, _GROUP), _round_up(n_tok, _GROUP))

    def _cached_need(t):
        return table_bytes + 2 * t * dim_pad * itemsize

    cached_tps = tps
    while cached_tps > 64 and _cached_need(cached_tps) + headroom > vmem_cap:
        cached_tps = max(64, _round_up(cached_tps // 2, _GROUP))
    table_fits = _cached_need(cached_tps) + headroom <= vmem_cap

    # Bytes-moved crossover: only preload+cache the table when the gather
    # itself moves at least as many bytes as the preload would.
    if force_path == "cached":
        use_cached = table_fits
    elif force_path == "gather":
        use_cached = False
    else:
        use_cached = table_fits and gather_bytes >= table_bytes

    if use_cached:
        tps = cached_tps
        n_blocks = pl.cdiv(n_tok, tps)
        core_splits = _num_core_splits() if n_blocks >= 2 else 1
        n_pad = _round_up(n_tok, tps * core_splits)
        n_blocks = n_pad // tps
        blocks_per_core = n_blocks // core_splits

        if n_pad != n_tok:
            # Pad with id 0 (always a valid row); padded rows sliced off below.
            flat_ids = jnp.pad(flat_ids, (0, n_pad - n_tok))
        emb_in = embedding_matrix
        if dim_pad != dim:
            # Lane-dense table + output: pad dim to a multiple of 128 lanes.
            emb_in = jnp.pad(embedding_matrix, ((0, 0), (0, dim_pad - dim)))

        kernel = _make_cached_table_kernel(tps, blocks_per_core)
        grid_spec = pltpu.PrefetchScalarGridSpec(
            num_scalar_prefetch=1,                          # ids land in SMEM
            grid=(core_splits, blocks_per_core),
            in_specs=[pl.BlockSpec(memory_space=pl.ANY)],   # table stays in HBM
            out_specs=pl.BlockSpec(
                (tps, dim_pad),
                lambda c, i, ids: (c * blocks_per_core + i, 0)),
            scratch_shapes=[pltpu.VMEM((vocab, dim_pad), dtype),
                            pltpu.SemaphoreType.DMA((1,))],
        )
        out_shape = jax.ShapeDtypeStruct((n_pad, dim_pad), dtype)
        dim_semantics = ("parallel", "arbitrary")
        vmem_limit = int(min(vmem_cap,
                             max(_cached_need(tps) + headroom, 32 << 20)))
    else:
        n_pad = _round_up(n_tok, tps)
        if n_pad != n_tok:
            flat_ids = jnp.pad(flat_ids, (0, n_pad - n_tok))
        emb_in = embedding_matrix    # unpadded; per-row DMAs copy `dim` cols

        window = max(1, min(dma_window, tps))
        window = 1 << (window.bit_length() - 1)   # power of two -> cheap mask

        kernel = _make_hbm_gather_kernel(tps, window)
        grid_spec = pltpu.PrefetchScalarGridSpec(
            num_scalar_prefetch=1,
            grid=(n_pad // tps,),
            in_specs=[pl.BlockSpec(memory_space=pl.ANY)],
            out_specs=pl.BlockSpec((tps, dim), lambda i, ids: (i, 0)),
            scratch_shapes=[pltpu.SemaphoreType.DMA((window,))],
        )
        out_shape = jax.ShapeDtypeStruct((n_pad, dim), dtype)
        dim_semantics = ("parallel",)
        vmem_limit = int(min(vmem_cap,
                             max(2 * tps * dim_pad * itemsize + headroom,
                                 32 << 20)))

    out = pl.pallas_call(
        kernel,
        out_shape=out_shape,
        grid_spec=grid_spec,
        compiler_params=pltpu.CompilerParams(
            dimension_semantics=dim_semantics,
            vmem_limit_bytes=vmem_limit,
        ),
    )(flat_ids, emb_in)

    return out[:n_tok, :dim].reshape(*orig_shape, dim)


if __name__ == "__main__":
    # Small, deterministic shapes consistent with the module's forward.
    vocab_size = 1000        # scaled-down stand-in for the file-level 100000
    embedding_dim = 32
    batch, seq = 2, 8

    key = jax.random.PRNGKey(0)
    k_emb, k_ids = jax.random.split(key)

    # Deterministic "randn"-style parameter init (torch.randn equivalent).
    embedding_matrix = jax.random.normal(
        k_emb, (vocab_size, embedding_dim), dtype=jnp.float32)
    input_ids = jax.random.randint(
        k_ids, (batch, seq), 0, vocab_size, dtype=jnp.int32)

    ref = embedding_matrix[input_ids]

    # Default: bytes-moved heuristic (few tokens -> windowed HBM row gather).
    out_default = jax.block_until_ready(
        custom_embedding(input_ids, embedding_matrix))
    assert out_default.shape == (batch, seq, embedding_dim)
    assert out_default.dtype == jnp.float32
    assert jnp.array_equal(out_default, ref)

    # Force the VMEM-cached-table path (lane-padded table, dense group stores).
    out_cached = jax.block_until_ready(
        custom_embedding(input_ids, embedding_matrix, force_path="cached"))
    assert jnp.array_equal(out_cached, ref)

    # Force the windowed HBM-gather fallback explicitly.
    out_gather = jax.block_until_ready(
        custom_embedding(input_ids, embedding_matrix, force_path="gather"))
    assert jnp.array_equal(out_gather, ref)

    print("KERNEL_OK")
</pallas_src>

<mosaic_0001>
module attributes {stable_mosaic.version = 11 : i64} {
  func.func @kernel(%arg0: i32, %arg1: memref<16xi32, #tpu.memory_space<smem>>, %arg2: memref<1000x32xf32, #tpu.memory_space<any>>, %arg3: memref<16x32xf32, #tpu.memory_space<vmem>>, %arg4: memref<16x!tpu.dma_semaphore, #tpu.memory_space<semaphore_mem>>) attributes {dimension_semantics = [#tpu.dimension_semantics<parallel>], iteration_bounds = array<i64: 1>, scalar_prefetch = 1 : i64, scratch_operands = 1 : i64, tpu.core_type = #tpu.core_type<tc>, window_params = [{}, {transform_indices = @transform_1, window_bounds = array<i64: 16, 32>}]} {
    %c16_i32 = arith.constant 16 : i32
    %0 = arith.muli %arg0, %c16_i32 : i32
    %c0_i32 = arith.constant 0 : i32
    %1 = arith.addi %0, %c0_i32 : i32
    %2 = arith.index_cast %1 : i32 to index
    %3 = memref.load %arg1[%2] : memref<16xi32, #tpu.memory_space<smem>>
    %c0_i32_0 = arith.constant 0 : i32
    %c0_i32_1 = arith.constant 0 : i32
    %c0_i32_2 = arith.constant 0 : i32
    %4 = tpu.memref_slice %arg2[%3, %c0_i32_2] : memref<1000x32xf32, #tpu.memory_space<any>> -> memref<1x32xf32, #tpu.memory_space<any>>
    %5 = tpu.memref_squeeze %4 : memref<1x32xf32, #tpu.memory_space<any>> -> memref<32xf32, #tpu.memory_space<any>>
    %c0_i32_3 = arith.constant 0 : i32
    %6 = tpu.memref_slice %arg3[%c0_i32_0, %c0_i32_3] : memref<16x32xf32, #tpu.memory_space<vmem>> -> memref<1x32xf32, #tpu.memory_space<vmem>>
    %7 = tpu.memref_squeeze %6 : memref<1x32xf32, #tpu.memory_space<vmem>> -> memref<32xf32, #tpu.memory_space<vmem>>
    %8 = tpu.memref_slice %arg4[%c0_i32_1] : memref<16x!tpu.dma_semaphore, #tpu.memory_space<semaphore_mem>> -> memref<1x!tpu.dma_semaphore, #tpu.memory_space<semaphore_mem>>
    %9 = tpu.memref_squeeze %8 : memref<1x!tpu.dma_semaphore, #tpu.memory_space<semaphore_mem>> -> memref<!tpu.dma_semaphore, #tpu.memory_space<semaphore_mem>>
    tpu.enqueue_dma source(%5 : memref<32xf32, #tpu.memory_space<any>>) target(%7 : memref<32xf32, #tpu.memory_space<vmem>>) target_semaphore(%9 : memref<!tpu.dma_semaphore, #tpu.memory_space<semaphore_mem>>)
    %c1_i32 = arith.constant 1 : i32
    %10 = arith.addi %0, %c1_i32 : i32
    %11 = arith.index_cast %10 : i32 to index
    %12 = memref.load %arg1[%11] : memref<16xi32, #tpu.memory_space<smem>>
    %c1_i32_4 = arith.constant 1 : i32
    %c1_i32_5 = arith.constant 1 : i32
    %c0_i32_6 = arith.constant 0 : i32
    %13 = tpu.memref_slice %arg2[%12, %c0_i32_6] : memref<1000x32xf32, #tpu.memory_space<any>> -> memref<1x32xf32, #tpu.memory_space<any>>
    %14 = tpu.memref_squeeze %13 : memref<1x32xf32, #tpu.memory_space<any>> -> memref<32xf32, #tpu.memory_space<any>>
    %c0_i32_7 = arith.constant 0 : i32
    %15 = tpu.memref_slice %arg3[%c1_i32_4, %c0_i32_7] : memref<16x32xf32, #tpu.memory_space<vmem>> -> memref<1x32xf32, #tpu.memory_space<vmem>>
    %16 = tpu.memref_squeeze %15 : memref<1x32xf32, #tpu.memory_space<vmem>> -> memref<32xf32, #tpu.memory_space<vmem>>
    %17 = tpu.memref_slice %arg4[%c1_i32_5] : memref<16x!tpu.dma_semaphore, #tpu.memory_space<semaphore_mem>> -> memref<1x!tpu.dma_semaphore, #tpu.memory_space<semaphore_mem>>
    %18 = tpu.memref_squeeze %17 : memref<1x!tpu.dma_semaphore, #tpu.memory_space<semaphore_mem>> -> memref<!tpu.dma_semaphore, #tpu.memory_space<semaphore_mem>>
    tpu.enqueue_dma source(%14 : memref<32xf32, #tpu.memory_space<any>>) target(%16 : memref<32xf32, #tpu.memory_space<vmem>>) target_semaphore(%18 : memref<!tpu.dma_semaphore, #tpu.memory_space<semaphore_mem>>)
    %c2_i32 = arith.constant 2 : i32
    %19 = arith.addi %0, %c2_i32 : i32
    %20 = arith.index_cast %19 : i32 to index
    %21 = memref.load %arg1[%20] : memref<16xi32, #tpu.memory_space<smem>>
    %c2_i32_8 = arith.constant 2 : i32
    %c2_i32_9 = arith.constant 2 : i32
    %c0_i32_10 = arith.constant 0 : i32
    %22 = tpu.memref_slice %arg2[%21, %c0_i32_10] : memref<1000x32xf32, #tpu.memory_space<any>> -> memref<1x32xf32, #tpu.memory_space<any>>
    %23 = tpu.memref_squeeze %22 : memref<1x32xf32, #tpu.memory_space<any>> -> memref<32xf32, #tpu.memory_space<any>>
    %c0_i32_11 = arith.constant 0 : i32
    %24 = tpu.memref_slice %arg3[%c2_i32_8, %c0_i32_11] : memref<16x32xf32, #tpu.memory_space<vmem>> -> memref<1x32xf32, #tpu.memory_space<vmem>>
    %25 = tpu.memref_squeeze %24 : memref<1x32xf32, #tpu.memory_space<vmem>> -> memref<32xf32, #tpu.memory_space<vmem>>
    %26 = tpu.memref_slice %arg4[%c2_i32_9] : memref<16x!tpu.dma_semaphore, #tpu.memory_space<semaphore_mem>> -> memref<1x!tpu.dma_semaphore, #tpu.memory_space<semaphore_mem>>
    %27 = tpu.memref_squeeze %26 : memref<1x!tpu.dma_semaphore, #tpu.memory_space<semaphore_mem>> -> memref<!tpu.dma_semaphore, #tpu.memory_space<semaphore_mem>>
    tpu.enqueue_dma source(%23 : memref<32xf32, #tpu.memory_space<any>>) target(%25 : memref<32xf32, #tpu.memory_space<vmem>>) target_semaphore(%27 : memref<!tpu.dma_semaphore, #tpu.memory_space<semaphore_mem>>)
    %c3_i32 = arith.constant 3 : i32
    %28 = arith.addi %0, %c3_i32 : i32
    %29 = arith.index_cast %28 : i32 to index
    %30 = memref.load %arg1[%29] : memref<16xi32, #tpu.memory_space<smem>>
    %c3_i32_12 = arith.constant 3 : i32
    %c3_i32_13 = arith.constant 3 : i32
    %c0_i32_14 = arith.constant 0 : i32
    %31 = tpu.memref_slice %arg2[%30, %c0_i32_14] : memref<1000x32xf32, #tpu.memory_space<any>> -> memref<1x32xf32, #tpu.memory_space<any>>
    %32 = tpu.memref_squeeze %31 : memref<1x32xf32, #tpu.memory_space<any>> -> memref<32xf32, #tpu.memory_space<any>>
    %c0_i32_15 = arith.constant 0 : i32
    %33 = tpu.memref_slice %arg3[%c3_i32_12, %c0_i32_15] : memref<16x32xf32, #tpu.memory_space<vmem>> -> memref<1x32xf32, #tpu.memory_space<vmem>>
    %34 = tpu.memref_squeeze %33 : memref<1x32xf32, #tpu.memory_space<vmem>> -> memref<32xf32, #tpu.memory_space<vmem>>
    %35 = tpu.memref_slice %arg4[%c3_i32_13] : memref<16x!tpu.dma_semaphore, #tpu.memory_space<semaphore_mem>> -> memref<1x!tpu.dma_semaphore, #tpu.memory_space<semaphore_mem>>
    %36 = tpu.memref_squeeze %35 : memref<1x!tpu.dma_semaphore, #tpu.memory_space<semaphore_mem>> -> memref<!tpu.dma_semaphore, #tpu.memory_space<semaphore_mem>>
    tpu.enqueue_dma source(%32 : memref<32xf32, #tpu.memory_space<any>>) target(%34 : memref<32xf32, #tpu.memory_space<vmem>>) target_semaphore(%36 : memref<!tpu.dma_semaphore, #tpu.memory_space<semaphore_mem>>)
    %c4_i32 = arith.constant 4 : i32
    %37 = arith.addi %0, %c4_i32 : i32
    %38 = arith.index_cast %37 : i32 to index
    %39 = memref.load %arg1[%38] : memref<16xi32, #tpu.memory_space<smem>>
    %c4_i32_16 = arith.constant 4 : i32
    %c4_i32_17 = arith.constant 4 : i32
    %c0_i32_18 = arith.constant 0 : i32
    %40 = tpu.memref_slice %arg2[%39, %c0_i32_18] : memref<1000x32xf32, #tpu.memory_space<any>> -> memref<1x32xf32, #tpu.memory_space<any>>
    %41 = tpu.memref_squeeze %40 : memref<1x32xf32, #tpu.memory_space<any>> -> memref<32xf32, #tpu.memory_space<any>>
    %c0_i32_19 = arith.constant 0 : i32
    %42 = tpu.memref_slice %arg3[%c4_i32_16, %c0_i32_19] : memref<16x32xf32, #tpu.memory_space<vmem>> -> memref<1x32xf32, #tpu.memory_space<vmem>>
    %43 = tpu.memref_squeeze %42 : memref<1x32xf32, #tpu.memory_space<vmem>> -> memref<32xf32, #tpu.memory_space<vmem>>
    %44 = tpu.memref_slice %arg4[%c4_i32_17] : memref<16x!tpu.dma_semaphore, #tpu.memory_space<semaphore_mem>> -> memref<1x!tpu.dma_semaphore, #tpu.memory_space<semaphore_mem>>
    %45 = tpu.memref_squeeze %44 : memref<1x!tpu.dma_semaphore, #tpu.memory_space<semaphore_mem>> -> memref<!tpu.dma_semaphore, #tpu.memory_space<semaphore_mem>>
    tpu.enqueue_dma source(%41 : memref<32xf32, #tpu.memory_space<any>>) target(%43 : memref<32xf32, #tpu.memory_space<vmem>>) target_semaphore(%45 : memref<!tpu.dma_semaphore, #tpu.memory_space<semaphore_mem>>)
    %c5_i32 = arith.constant 5 : i32
    %46 = arith.addi %0, %c5_i32 : i32
    %47 = arith.index_cast %46 : i32 to index
    %48 = memref.load %arg1[%47] : memref<16xi32, #tpu.memory_space<smem>>
    %c5_i32_20 = arith.constant 5 : i32
    %c5_i32_21 = arith.constant 5 : i32
    %c0_i32_22 = arith.constant 0 : i32
    %49 = tpu.memref_slice %arg2[%48, %c0_i32_22] : memref<1000x32xf32, #tpu.memory_space<any>> -> memref<1x32xf32, #tpu.memory_space<any>>
    %50 = tpu.memref_squeeze %49 : memref<1x32xf32, #tpu.memory_space<any>> -> memref<32xf32, #tpu.memory_space<any>>
    %c0_i32_23 = arith.constant 0 : i32
    %51 = tpu.memref_slice %arg3[%c5_i32_20, %c0_i32_23] : memref<16x32xf32, #tpu.memory_space<vmem>> -> memref<1x32xf32, #tpu.memory_space<vmem>>
    %52 = tpu.memref_squeeze %51 : memref<1x32xf32, #tpu.memory_space<vmem>> -> memref<32xf32, #tpu.memory_space<vmem>>
    %53 = tpu.memref_slice %arg4[%c5_i32_21] : memref<16x!tpu.dma_semaphore, #tpu.memory_space<semaphore_mem>> -> memref<1x!tpu.dma_semaphore, #tpu.memory_space<semaphore_mem>>
    %54 = tpu.memref_squeeze %53 : memref<1x!tpu.dma_semaphore, #tpu.memory_space<semaphore_mem>> -> memref<!tpu.dma_semaphore, #tpu.memory_space<semaphore_mem>>
    tpu.enqueue_dma source(%50 : memref<32xf32, #tpu.memory_space<any>>) target(%52 : memref<32xf32, #tpu.memory_space<vmem>>) target_semaphore(%54 : memref<!tpu.dma_semaphore, #tpu.memory_space<semaphore_mem>>)
    %c6_i32 = arith.constant 6 : i32
    %55 = arith.addi %0, %c6_i32 : i32
    %56 = arith.index_cast %55 : i32 to index
    %57 = memref.load %arg1[%56] : memref<16xi32, #tpu.memory_space<smem>>
    %c6_i32_24 = arith.constant 6 : i32
    %c6_i32_25 = arith.constant 6 : i32
    %c0_i32_26 = arith.constant 0 : i32
    %58 = tpu.memref_slice %arg2[%57, %c0_i32_26] : memref<1000x32xf32, #tpu.memory_space<any>> -> memref<1x32xf32, #tpu.memory_space<any>>
    %59 = tpu.memref_squeeze %58 : memref<1x32xf32, #tpu.memory_space<any>> -> memref<32xf32, #tpu.memory_space<any>>
    %c0_i32_27 = arith.constant 0 : i32
    %60 = tpu.memref_slice %arg3[%c6_i32_24, %c0_i32_27] : memref<16x32xf32, #tpu.memory_space<vmem>> -> memref<1x32xf32, #tpu.memory_space<vmem>>
    %61 = tpu.memref_squeeze %60 : memref<1x32xf32, #tpu.memory_space<vmem>> -> memref<32xf32, #tpu.memory_space<vmem>>
    %62 = tpu.memref_slice %arg4[%c6_i32_25] : memref<16x!tpu.dma_semaphore, #tpu.memory_space<semaphore_mem>> -> memref<1x!tpu.dma_semaphore, #tpu.memory_space<semaphore_mem>>
    %63 = tpu.memref_squeeze %62 : memref<1x!tpu.dma_semaphore, #tpu.memory_space<semaphore_mem>> -> memref<!tpu.dma_semaphore, #tpu.memory_space<semaphore_mem>>
    tpu.enqueue_dma source(%59 : memref<32xf32, #tpu.memory_space<any>>) target(%61 : memref<32xf32, #tpu.memory_space<vmem>>) target_semaphore(%63 : memref<!tpu.dma_semaphore, #tpu.memory_space<semaphore_mem>>)
    %c7_i32 = arith.constant 7 : i32
    %64 = arith.addi %0, %c7_i32 : i32
    %65 = arith.index_cast %64 : i32 to index
    %66 = memref.load %arg1[%65] : memref<16xi32, #tpu.memory_space<smem>>
    %c7_i32_28 = arith.constant 7 : i32
    %c7_i32_29 = arith.constant 7 : i32
    %c0_i32_30 = arith.constant 0 : i32
    %67 = tpu.memref_slice %arg2[%66, %c0_i32_30] : memref<1000x32xf32, #tpu.memory_space<any>> -> memref<1x32xf32, #tpu.memory_space<any>>
    %68 = tpu.memref_squeeze %67 : memref<1x32xf32, #tpu.memory_space<any>> -> memref<32xf32, #tpu.memory_space<any>>
    %c0_i32_31 = arith.constant 0 : i32
    %69 = tpu.memref_slice %arg3[%c7_i32_28, %c0_i32_31] : memref<16x32xf32, #tpu.memory_space<vmem>> -> memref<1x32xf32, #tpu.memory_space<vmem>>
    %70 = tpu.memref_squeeze %69 : memref<1x32xf32, #tpu.memory_space<vmem>> -> memref<32xf32, #tpu.memory_space<vmem>>
    %71 = tpu.memref_slice %arg4[%c7_i32_29] : memref<16x!tpu.dma_semaphore, #tpu.memory_space<semaphore_mem>> -> memref<1x!tpu.dma_semaphore, #tpu.memory_space<semaphore_mem>>
    %72 = tpu.memref_squeeze %71 : memref<1x!tpu.dma_semaphore, #tpu.memory_space<semaphore_mem>> -> memref<!tpu.dma_semaphore, #tpu.memory_space<semaphore_mem>>
    tpu.enqueue_dma source(%68 : memref<32xf32, #tpu.memory_space<any>>) target(%70 : memref<32xf32, #tpu.memory_space<vmem>>) target_semaphore(%72 : memref<!tpu.dma_semaphore, #tpu.memory_space<semaphore_mem>>)
    %c8_i32 = arith.constant 8 : i32
    %73 = arith.addi %0, %c8_i32 : i32
    %74 = arith.index_cast %73 : i32 to index
    %75 = memref.load %arg1[%74] : memref<16xi32, #tpu.memory_space<smem>>
    %c8_i32_32 = arith.constant 8 : i32
    %c8_i32_33 = arith.constant 8 : i32
    %c0_i32_34 = arith.constant 0 : i32
    %76 = tpu.memref_slice %arg2[%75, %c0_i32_34] : memref<1000x32xf32, #tpu.memory_space<any>> -> memref<1x32xf32, #tpu.memory_space<any>>
    %77 = tpu.memref_squeeze %76 : memref<1x32xf32, #tpu.memory_space<any>> -> memref<32xf32, #tpu.memory_space<any>>
    %c0_i32_35 = arith.constant 0 : i32
    %78 = tpu.memref_slice %arg3[%c8_i32_32, %c0_i32_35] : memref<16x32xf32, #tpu.memory_space<vmem>> -> memref<1x32xf32, #tpu.memory_space<vmem>>
    %79 = tpu.memref_squeeze %78 : memref<1x32xf32, #tpu.memory_space<vmem>> -> memref<32xf32, #tpu.memory_space<vmem>>
    %80 = tpu.memref_slice %arg4[%c8_i32_33] : memref<16x!tpu.dma_semaphore, #tpu.memory_space<semaphore_mem>> -> memref<1x!tpu.dma_semaphore, #tpu.memory_space<semaphore_mem>>
    %81 = tpu.memref_squeeze %80 : memref<1x!tpu.dma_semaphore, #tpu.memory_space<semaphore_mem>> -> memref<!tpu.dma_semaphore, #tpu.memory_space<semaphore_mem>>
    tpu.enqueue_dma source(%77 : memref<32xf32, #tpu.memory_space<any>>) target(%79 : memref<32xf32, #tpu.memory_space<vmem>>) target_semaphore(%81 : memref<!tpu.dma_semaphore, #tpu.memory_space<semaphore_mem>>)
    %c9_i32 = arith.constant 9 : i32
    %82 = arith.addi %0, %c9_i32 : i32
    %83 = arith.index_cast %82 : i32 to index
    %84 = memref.load %arg1[%83] : memref<16xi32, #tpu.memory_space<smem>>
    %c9_i32_36 = arith.constant 9 : i32
    %c9_i32_37 = arith.constant 9 : i32
    %c0_i32_38 = arith.constant 0 : i32
    %85 = tpu.memref_slice %arg2[%84, %c0_i32_38] : memref<1000x32xf32, #tpu.memory_space<any>> -> memref<1x32xf32, #tpu.memory_space<any>>
    %86 = tpu.memref_squeeze %85 : memref<1x32xf32, #tpu.memory_space<any>> -> memref<32xf32, #tpu.memory_space<any>>
    %c0_i32_39 = arith.constant 0 : i32
    %87 = tpu.memref_slice %arg3[%c9_i32_36, %c0_i32_39] : memref<16x32xf32, #tpu.memory_space<vmem>> -> memref<1x32xf32, #tpu.memory_space<vmem>>
    %88 = tpu.memref_squeeze %87 : memref<1x32xf32, #tpu.memory_space<vmem>> -> memref<32xf32, #tpu.memory_space<vmem>>
    %89 = tpu.memref_slice %arg4[%c9_i32_37] : memref<16x!tpu.dma_semaphore, #tpu.memory_space<semaphore_mem>> -> memref<1x!tpu.dma_semaphore, #tpu.memory_space<semaphore_mem>>
    %90 = tpu.memref_squeeze %89 : memref<1x!tpu.dma_semaphore, #tpu.memory_space<semaphore_mem>> -> memref<!tpu.dma_semaphore, #tpu.memory_space<semaphore_mem>>
    tpu.enqueue_dma source(%86 : memref<32xf32, #tpu.memory_space<any>>) target(%88 : memref<32xf32, #tpu.memory_space<vmem>>) target_semaphore(%90 : memref<!tpu.dma_semaphore, #tpu.memory_space<semaphore_mem>>)
    %c10_i32 = arith.constant 10 : i32
    %91 = arith.addi %0, %c10_i32 : i32
    %92 = arith.index_cast %91 : i32 to index
    %93 = memref.load %arg1[%92] : memref<16xi32, #tpu.memory_space<smem>>
    %c10_i32_40 = arith.constant 10 : i32
    %c10_i32_41 = arith.constant 10 : i32
    %c0_i32_42 = arith.constant 0 : i32
    %94 = tpu.memref_slice %arg2[%93, %c0_i32_42] : memref<1000x32xf32, #tpu.memory_space<any>> -> memref<1x32xf32, #tpu.memory_space<any>>
    %95 = tpu.memref_squeeze %94 : memref<1x32xf32, #tpu.memory_space<any>> -> memref<32xf32, #tpu.memory_space<any>>
    %c0_i32_43 = arith.constant 0 : i32
    %96 = tpu.memref_slice %arg3[%c10_i32_40, %c0_i32_43] : memref<16x32xf32, #tpu.memory_space<vmem>> -> memref<1x32xf32, #tpu.memory_space<vmem>>
    %97 = tpu.memref_squeeze %96 : memref<1x32xf32, #tpu.memory_space<vmem>> -> memref<32xf32, #tpu.memory_space<vmem>>
    %98 = tpu.memref_slice %arg4[%c10_i32_41] : memref<16x!tpu.dma_semaphore, #tpu.memory_space<semaphore_mem>> -> memref<1x!tpu.dma_semaphore, #tpu.memory_space<semaphore_mem>>
    %99 = tpu.memref_squeeze %98 : memref<1x!tpu.dma_semaphore, #tpu.memory_space<semaphore_mem>> -> memref<!tpu.dma_semaphore, #tpu.memory_space<semaphore_mem>>
    tpu.enqueue_dma source(%95 : memref<32xf32, #tpu.memory_space<any>>) target(%97 : memref<32xf32, #tpu.memory_space<vmem>>) target_semaphore(%99 : memref<!tpu.dma_semaphore, #tpu.memory_space<semaphore_mem>>)
    %c11_i32 = arith.constant 11 : i32
    %100 = arith.addi %0, %c11_i32 : i32
    %101 = arith.index_cast %100 : i32 to index
    %102 = memref.load %arg1[%101] : memref<16xi32, #tpu.memory_space<smem>>
    %c11_i32_44 = arith.constant 11 : i32
    %c11_i32_45 = arith.constant 11 : i32
    %c0_i32_46 = arith.constant 0 : i32
    %103 = tpu.memref_slice %arg2[%102, %c0_i32_46] : memref<1000x32xf32, #tpu.memory_space<any>> -> memref<1x32xf32, #tpu.memory_space<any>>
    %104 = tpu.memref_squeeze %103 : memref<1x32xf32, #tpu.memory_space<any>> -> memref<32xf32, #tpu.memory_space<any>>
    %c0_i32_47 = arith.constant 0 : i32
    %105 = tpu.memref_slice %arg3[%c11_i32_44, %c0_i32_47] : memref<16x32xf32, #tpu.memory_space<vmem>> -> memref<1x32xf32, #tpu.memory_space<vmem>>
    %106 = tpu.memref_squeeze %105 : memref<1x32xf32, #tpu.memory_space<vmem>> -> memref<32xf32, #tpu.memory_space<vmem>>
    %107 = tpu.memref_slice %arg4[%c11_i32_45] : memref<16x!tpu.dma_semaphore, #tpu.memory_space<semaphore_mem>> -> memref<1x!tpu.dma_semaphore, #tpu.memory_space<semaphore_mem>>
    %108 = tpu.memref_squeeze %107 : memref<1x!tpu.dma_semaphore, #tpu.memory_space<semaphore_mem>> -> memref<!tpu.dma_semaphore, #tpu.memory_space<semaphore_mem>>
    tpu.enqueue_dma source(%104 : memref<32xf32, #tpu.memory_space<any>>) target(%106 : memref<32xf32, #tpu.memory_space<vmem>>) target_semaphore(%108 : memref<!tpu.dma_semaphore, #tpu.memory_space<semaphore_mem>>)
    %c12_i32 = arith.constant 12 : i32
    %109 = arith.addi %0, %c12_i32 : i32
    %110 = arith.index_cast %109 : i32 to index
    %111 = memref.load %arg1[%110] : memref<16xi32, #tpu.memory_space<smem>>
    %c12_i32_48 = arith.constant 12 : i32
    %c12_i32_49 = arith.constant 12 : i32
    %c0_i32_50 = arith.constant 0 : i32
    %112 = tpu.memref_slice %arg2[%111, %c0_i32_50] : memref<1000x32xf32, #tpu.memory_space<any>> -> memref<1x32xf32, #tpu.memory_space<any>>
    %113 = tpu.memref_squeeze %112 : memref<1x32xf32, #tpu.memory_space<any>> -> memref<32xf32, #tpu.memory_space<any>>
    %c0_i32_51 = arith.constant 0 : i32
    %114 = tpu.memref_slice %arg3[%c12_i32_48, %c0_i32_51] : memref<16x32xf32, #tpu.memory_space<vmem>> -> memref<1x32xf32, #tpu.memory_space<vmem>>
    %115 = tpu.memref_squeeze %114 : memref<1x32xf32, #tpu.memory_space<vmem>> -> memref<32xf32, #tpu.memory_space<vmem>>
    %116 = tpu.memref_slice %arg4[%c12_i32_49] : memref<16x!tpu.dma_semaphore, #tpu.memory_space<semaphore_mem>> -> memref<1x!tpu.dma_semaphore, #tpu.memory_space<semaphore_mem>>
    %117 = tpu.memref_squeeze %116 : memref<1x!tpu.dma_semaphore, #tpu.memory_space<semaphore_mem>> -> memref<!tpu.dma_semaphore, #tpu.memory_space<semaphore_mem>>
    tpu.enqueue_dma source(%113 : memref<32xf32, #tpu.memory_space<any>>) target(%115 : memref<32xf32, #tpu.memory_space<vmem>>) target_semaphore(%117 : memref<!tpu.dma_semaphore, #tpu.memory_space<semaphore_mem>>)
    %c13_i32 = arith.constant 13 : i32
    %118 = arith.addi %0, %c13_i32 : i32
    %119 = arith.index_cast %118 : i32 to index
    %120 = memref.load %arg1[%119] : memref<16xi32, #tpu.memory_space<smem>>
    %c13_i32_52 = arith.constant 13 : i32
    %c13_i32_53 = arith.constant 13 : i32
    %c0_i32_54 = arith.constant 0 : i32
    %121 = tpu.memref_slice %arg2[%120, %c0_i32_54] : memref<1000x32xf32, #tpu.memory_space<any>> -> memref<1x32xf32, #tpu.memory_space<any>>
    %122 = tpu.memref_squeeze %121 : memref<1x32xf32, #tpu.memory_space<any>> -> memref<32xf32, #tpu.memory_space<any>>
    %c0_i32_55 = arith.constant 0 : i32
    %123 = tpu.memref_slice %arg3[%c13_i32_52, %c0_i32_55] : memref<16x32xf32, #tpu.memory_space<vmem>> -> memref<1x32xf32, #tpu.memory_space<vmem>>
    %124 = tpu.memref_squeeze %123 : memref<1x32xf32, #tpu.memory_space<vmem>> -> memref<32xf32, #tpu.memory_space<vmem>>
    %125 = tpu.memref_slice %arg4[%c13_i32_53] : memref<16x!tpu.dma_semaphore, #tpu.memory_space<semaphore_mem>> -> memref<1x!tpu.dma_semaphore, #tpu.memory_space<semaphore_mem>>
    %126 = tpu.memref_squeeze %125 : memref<1x!tpu.dma_semaphore, #tpu.memory_space<semaphore_mem>> -> memref<!tpu.dma_semaphore, #tpu.memory_space<semaphore_mem>>
    tpu.enqueue_dma source(%122 : memref<32xf32, #tpu.memory_space<any>>) target(%124 : memref<32xf32, #tpu.memory_space<vmem>>) target_semaphore(%126 : memref<!tpu.dma_semaphore, #tpu.memory_space<semaphore_mem>>)
    %c14_i32 = arith.constant 14 : i32
    %127 = arith.addi %0, %c14_i32 : i32
    %128 = arith.index_cast %127 : i32 to index
    %129 = memref.load %arg1[%128] : memref<16xi32, #tpu.memory_space<smem>>
    %c14_i32_56 = arith.constant 14 : i32
    %c14_i32_57 = arith.constant 14 : i32
    %c0_i32_58 = arith.constant 0 : i32
    %130 = tpu.memref_slice %arg2[%129, %c0_i32_58] : memref<1000x32xf32, #tpu.memory_space<any>> -> memref<1x32xf32, #tpu.memory_space<any>>
    %131 = tpu.memref_squeeze %130 : memref<1x32xf32, #tpu.memory_space<any>> -> memref<32xf32, #tpu.memory_space<any>>
    %c0_i32_59 = arith.constant 0 : i32
    %132 = tpu.memref_slice %arg3[%c14_i32_56, %c0_i32_59] : memref<16x32xf32, #tpu.memory_space<vmem>> -> memref<1x32xf32, #tpu.memory_space<vmem>>
    %133 = tpu.memref_squeeze %132 : memref<1x32xf32, #tpu.memory_space<vmem>> -> memref<32xf32, #tpu.memory_space<vmem>>
    %134 = tpu.memref_slice %arg4[%c14_i32_57] : memref<16x!tpu.dma_semaphore, #tpu.memory_space<semaphore_mem>> -> memref<1x!tpu.dma_semaphore, #tpu.memory_space<semaphore_mem>>
    %135 = tpu.memref_squeeze %134 : memref<1x!tpu.dma_semaphore, #tpu.memory_space<semaphore_mem>> -> memref<!tpu.dma_semaphore, #tpu.memory_space<semaphore_mem>>
    tpu.enqueue_dma source(%131 : memref<32xf32, #tpu.memory_space<any>>) target(%133 : memref<32xf32, #tpu.memory_space<vmem>>) target_semaphore(%135 : memref<!tpu.dma_semaphore, #tpu.memory_space<semaphore_mem>>)
    %c15_i32 = arith.constant 15 : i32
    %136 = arith.addi %0, %c15_i32 : i32
    %137 = arith.index_cast %136 : i32 to index
    %138 = memref.load %arg1[%137] : memref<16xi32, #tpu.memory_space<smem>>
    %c15_i32_60 = arith.constant 15 : i32
    %c15_i32_61 = arith.constant 15 : i32
    %c0_i32_62 = arith.constant 0 : i32
    %139 = tpu.memref_slice %arg2[%138, %c0_i32_62] : memref<1000x32xf32, #tpu.memory_space<any>> -> memref<1x32xf32, #tpu.memory_space<any>>
    %140 = tpu.memref_squeeze %139 : memref<1x32xf32, #tpu.memory_space<any>> -> memref<32xf32, #tpu.memory_space<any>>
    %c0_i32_63 = arith.constant 0 : i32
    %141 = tpu.memref_slice %arg3[%c15_i32_60, %c0_i32_63] : memref<16x32xf32, #tpu.memory_space<vmem>> -> memref<1x32xf32, #tpu.memory_space<vmem>>
    %142 = tpu.memref_squeeze %141 : memref<1x32xf32, #tpu.memory_space<vmem>> -> memref<32xf32, #tpu.memory_space<vmem>>
    %143 = tpu.memref_slice %arg4[%c15_i32_61] : memref<16x!tpu.dma_semaphore, #tpu.memory_space<semaphore_mem>> -> memref<1x!tpu.dma_semaphore, #tpu.memory_space<semaphore_mem>>
    %144 = tpu.memref_squeeze %143 : memref<1x!tpu.dma_semaphore, #tpu.memory_space<semaphore_mem>> -> memref<!tpu.dma_semaphore, #tpu.memory_space<semaphore_mem>>
    tpu.enqueue_dma source(%140 : memref<32xf32, #tpu.memory_space<any>>) target(%142 : memref<32xf32, #tpu.memory_space<vmem>>) target_semaphore(%144 : memref<!tpu.dma_semaphore, #tpu.memory_space<semaphore_mem>>)
    %c0_i32_64 = arith.constant 0 : i32
    %c16_i32_65 = arith.constant 16 : i32
    %145 = arith.addi %c0_i32_64, %c16_i32_65 : i32
    %c1_i32_66 = arith.constant 1 : i32
    scf.for %arg5 = %c0_i32_64 to %145 step %c1_i32_66  : i32 {
      %c16_i32_68 = arith.constant 16 : i32
      %146 = arith.addi %arg5, %c16_i32_68 : i32
      %c16_i32_69 = arith.constant 16 : i32
      %147 = arith.cmpi slt, %146, %c16_i32_69 : i32
      %148 = arith.extui %147 : i1 to i32
      %c0_i32_70 = arith.constant 0 : i32
      %149 = arith.cmpi ne, %148, %c0_i32_70 : i32
      scf.if %149 {
        %c16_i32_75 = arith.constant 16 : i32
        %157 = arith.addi %arg5, %c16_i32_75 : i32
        %158 = arith.addi %0, %157 : i32
        %159 = arith.index_cast %158 : i32 to index
        %160 = memref.load %arg1[%159] : memref<16xi32, #tpu.memory_space<smem>>
        %c15_i32_76 = arith.constant 15 : i32
        %161 = arith.andi %157, %c15_i32_76 : i32
        %c0_i32_77 = arith.constant 0 : i32
        %162 = tpu.memref_slice %arg2[%160, %c0_i32_77] : memref<1000x32xf32, #tpu.memory_space<any>> -> memref<1x32xf32, #tpu.memory_space<any>>
        %163 = tpu.memref_squeeze %162 : memref<1x32xf32, #tpu.memory_space<any>> -> memref<32xf32, #tpu.memory_space<any>>
        %c0_i32_78 = arith.constant 0 : i32
        %164 = tpu.memref_slice %arg3[%157, %c0_i32_78] : memref<16x32xf32, #tpu.memory_space<vmem>> -> memref<1x32xf32, #tpu.memory_space<vmem>>
        %165 = tpu.memref_squeeze %164 : memref<1x32xf32, #tpu.memory_space<vmem>> -> memref<32xf32, #tpu.memory_space<vmem>>
        %166 = tpu.memref_slice %arg4[%161] : memref<16x!tpu.dma_semaphore, #tpu.memory_space<semaphore_mem>> -> memref<1x!tpu.dma_semaphore, #tpu.memory_space<semaphore_mem>>
        %167 = tpu.memref_squeeze %166 : memref<1x!tpu.dma_semaphore, #tpu.memory_space<semaphore_mem>> -> memref<!tpu.dma_semaphore, #tpu.memory_space<semaphore_mem>>
        tpu.enqueue_dma source(%163 : memref<32xf32, #tpu.memory_space<any>>) target(%165 : memref<32xf32, #tpu.memory_space<vmem>>) target_semaphore(%167 : memref<!tpu.dma_semaphore, #tpu.memory_space<semaphore_mem>>)
      } else {
      }
      %c15_i32_71 = arith.constant 15 : i32
      %150 = arith.andi %arg5, %c15_i32_71 : i32
      %c0_i32_72 = arith.constant 0 : i32
      %c0_i32_73 = arith.constant 0 : i32
      %151 = tpu.memref_slice %arg2[%c0_i32_72, %c0_i32_73] : memref<1000x32xf32, #tpu.memory_space<any>> -> memref<1x32xf32, #tpu.memory_space<any>>
      %152 = tpu.memref_squeeze %151 : memref<1x32xf32, #tpu.memory_space<any>> -> memref<32xf32, #tpu.memory_space<any>>
      %c0_i32_74 = arith.constant 0 : i32
      %153 = tpu.memref_slice %arg3[%arg5, %c0_i32_74] : memref<16x32xf32, #tpu.memory_space<vmem>> -> memref<1x32xf32, #tpu.memory_space<vmem>>
      %154 = tpu.memref_squeeze %153 : memref<1x32xf32, #tpu.memory_space<vmem>> -> memref<32xf32, #tpu.memory_space<vmem>>
      %155 = tpu.memref_slice %arg4[%150] : memref<16x!tpu.dma_semaphore, #tpu.memory_space<semaphore_mem>> -> memref<1x!tpu.dma_semaphore, #tpu.memory_space<semaphore_mem>>
      %156 = tpu.memref_squeeze %155 : memref<1x!tpu.dma_semaphore, #tpu.memory_space<semaphore_mem>> -> memref<!tpu.dma_semaphore, #tpu.memory_space<semaphore_mem>>
      tpu.wait_dma2 semaphore(%156 : memref<!tpu.dma_semaphore, #tpu.memory_space<semaphore_mem>>) src(%152 : memref<32xf32, #tpu.memory_space<any>>) dst(%154 : memref<32xf32, #tpu.memory_space<vmem>>)
    }
    %c16_i32_67 = arith.constant 16 : i32
    return
  }
  func.func @transform_1(%arg0: i32, %arg1: memref<16xi32, #tpu.memory_space<smem>>) -> (i32, i32) {
    %c0_i32 = arith.constant 0 : i32
    %c0_i32_0 = arith.constant 0 : i32
    return %arg0, %c0_i32 : i32, i32
  }
}

</mosaic_0001>

<llo_original>
// kernel: tpu_custom_call.1
$region0: #{tpu_custom_call.1}
  #allocation0 [shape = 'u32[]', space=smem, size = 0x4, offset = 0x4, fixed_abs, tag = 'smem constant byte address 0x4 - core index']
  #allocation1 [shape = 'u32[72,128]{1,0:T(1,128)}', space=vmem, size = 0x9000, scoped, tag = 'internal scratch']
  #allocation2 [shape = 's32[16]{0}', space=sflag, size = 0x40, scoped, tag = 'scratch operand']
  #allocation3 [shape = 's32[1]{0}', space=sflag, size = 0x4, scoped, tag = 'scoped memory for tpu_custom_call.1']
  #allocation4 [shape = 'u8[512]{0}', space=smem, size = 0x200, scoped, tag = 'prefetched SMEM operand 0']
  #allocation7 [shape = 's32[]', space=sflag, size = 0x4, offset = 0, fixed_abs, tag = 'sflag constant byte address 0x0 - dummy sync flag']
  #allocation8 [shape = 's32[]', space=sflag, size = 0x4, offset = 0, fixed_abs, tag = 'sflag constant byte address 0x0 - dummy sync flag']
  #allocation9 [shape = 's32[]', space=sflag, size = 0x4, offset = 0, fixed_abs, tag = 'sflag constant byte address 0x0 - dummy sync flag']
  #allocation10 [shape = 's32[]', space=sflag, size = 0x4, offset = 0, fixed_abs, tag = 'sflag constant byte address 0x0 - dummy sync flag']
  #allocation11 [shape = 's32[]', space=sflag, size = 0x4, offset = 0, fixed_abs, tag = 'sflag constant byte address 0x0 - dummy sync flag']
  #allocation12 [shape = 's32[]', space=sflag, size = 0x4, offset = 0, fixed_abs, tag = 'sflag constant byte address 0x0 - dummy sync flag']
  #allocation13 [shape = 's32[]', space=sflag, size = 0x4, offset = 0, fixed_abs, tag = 'sflag constant byte address 0x0 - dummy sync flag']
  #allocation14 [shape = 's32[]', space=sflag, size = 0x4, offset = 0, fixed_abs, tag = 'sflag constant byte address 0x0 - dummy sync flag']
  #allocation15 [shape = 's32[]', space=sflag, size = 0x4, offset = 0, fixed_abs, tag = 'sflag constant byte address 0x0 - dummy sync flag']
  #allocation16 [shape = 's32[]', space=sflag, size = 0x4, offset = 0, fixed_abs, tag = 'sflag constant byte address 0x0 - dummy sync flag']
  #allocation17 [shape = 's32[]', space=sflag, size = 0x4, offset = 0, fixed_abs, tag = 'sflag constant byte address 0x0 - dummy sync flag']
  #allocation18 [shape = 's32[]', space=sflag, size = 0x4, offset = 0, fixed_abs, tag = 'sflag constant byte address 0x0 - dummy sync flag']
  #allocation19 [shape = 's32[]', space=sflag, size = 0x4, offset = 0, fixed_abs, tag = 'sflag constant byte address 0x0 - dummy sync flag']
  #allocation20 [shape = 's32[]', space=sflag, size = 0x4, offset = 0, fixed_abs, tag = 'sflag constant byte address 0x0 - dummy sync flag']
  #allocation21 [shape = 's32[]', space=sflag, size = 0x4, offset = 0, fixed_abs, tag = 'sflag constant byte address 0x0 - dummy sync flag']
  #allocation22 [shape = 's32[]', space=sflag, size = 0x4, offset = 0, fixed_abs, tag = 'sflag constant byte address 0x0 - dummy sync flag']
  #allocation23 [shape = 's32[]', space=sflag, size = 0x4, offset = 0, fixed_abs, tag = 'sflag constant byte address 0x0 - dummy sync flag']
  %s0 = inlined_call_operand.vmem [shape: s32[16], index: 0, kind: input, shape index: {}]
  %s1 = inlined_call_operand.vmem [shape: f32[1000,32], index: 1, kind: input, shape index: {}]
  %s2 = inlined_call_operand.hbm [shape: f32[16,32], index: 2, kind: output, shape index: {}]
  %s3 = sld [smem:[#allocation0]]
  $region531: #{tpu_custom_call.1} parent=0
    _
  %s5 = ssub.s32 1, %s3
  %s6 = scalar_select 0, %s5, %s3
  %s8 = sshll.u32 %s0, 4
  %s9 = int_to_ptr.vmem [resolvable:$true] %s8
  %11 = dma.vmem_to_smem %s9, 16, [#allocation4], [#allocation3]
  %13 = dma.done [#allocation3], 16
  %14 = sfence
  $region1: #{tpu_custom_call.1} parent=0
    #allocation5 [shape = 'u8[8192]{0}', space=vmem, size = 0x2000, scoped, tag = 'output window, operand 0, single buffered']
    #allocation6 [shape = 's32[1]{0}', space=sflag, size = 0x4, scoped, tag = 'scoped memory for tpu_custom_call.1']
    %15 = vsyncpa [#allocation6], 0
    %s16 = smul.u32 0, 16
    %s17 = sld [smem:[#allocation4 + %s16]]
    %s18 = scalar_lea.vmem %s1, %s17
    // Predicated region
    $region2: #{tpu_custom_call.1} parent=1 // pred_check
      _
    $region3: #{tpu_custom_call.1} parent=1 // pred_check_branch
      %20 = sbr.rel target = $region5
    $region4: #{tpu_custom_call.1} parent=1 // pred_region
      // Predicated region
      $region17: #{tpu_custom_call.1} parent=4 // pred_check
        _
      $region18: #{tpu_custom_call.1} parent=4 // pred_check_branch
        %36 = sbr.rel (0) target = $region20
      $region19: #{tpu_custom_call.1} parent=4 // pred_region
        %s38 = ssub.s32 2, 1
        loop: start=0, step=1, limit=1
        $region21: #{tpu_custom_call.1} parent=19 // loop_pre_header
          _
        $region22: #{tpu_custom_call.1} parent=19 // loop_header
          %s40 = sphi 0, %s44
          %p41 = scmp.ge.s32.totalorder %s40, 1
          %s45 = sphi %s18, %s18
          %s46 = sphi [#allocation5], [#allocation5]
        $region23: #{tpu_custom_call.1} parent=19 // loop_header_branch
          %43 = sbr.rel (%p41) target = $region27
        $region24: #{tpu_custom_call.1} parent=19 // loop_body
          %v47 = vld [vmem:[%s45] sm:%s38]
          %48 = vst [vmem:[%s46] sm:%s38] %v47
        $region25: #{tpu_custom_call.1} parent=19 // loop_footer
          %s44 = sadd.s32 1, %s40
        $region26: #{tpu_custom_call.1} parent=19 // loop_footer_branch
          %39 = sbr.rel target = $region22
        $region27: #{tpu_custom_call.1} parent=19 // loop_exit
          _
      $region20: #{tpu_custom_call.1} parent=4 // pred_fallthru
        _
    $region5: #{tpu_custom_call.1} parent=1 // pred_fallthru
      _
    // Predicated region
    $region6: #{tpu_custom_call.1} parent=1 // pred_check
      _
    $region7: #{tpu_custom_call.1} parent=1 // pred_check_branch
      %22 = sbr.rel (0) target = $region9
    $region8: #{tpu_custom_call.1} parent=1 // pred_region
      %s24 = ssub.s32 2, 1
      loop: start=0, step=1, limit=1
      $region10: #{tpu_custom_call.1} parent=8 // loop_pre_header
        _
      $region11: #{tpu_custom_call.1} parent=8 // loop_header
        %s26 = sphi 0, %s30
        %p27 = scmp.ge.s32.totalorder %s26, 1
        %s31 = sphi %s18, %s18
        %s32 = sphi [#allocation5], [#allocation5]
      $region12: #{tpu_custom_call.1} parent=8 // loop_header_branch
        %29 = sbr.rel (%p27) target = $region16
      $region13: #{tpu_custom_call.1} parent=8 // loop_body
        %v33 = vld [vmem:[%s31] sm:%s24]
        %34 = vst [vmem:[%s32] sm:%s24] %v33
      $region14: #{tpu_custom_call.1} parent=8 // loop_footer
        %s30 = sadd.s32 1, %s26
      $region15: #{tpu_custom_call.1} parent=8 // loop_footer_branch
        %25 = sbr.rel target = $region11
      $region16: #{tpu_custom_call.1} parent=8 // loop_exit
        _
    $region9: #{tpu_custom_call.1} parent=1 // pred_fallthru
      _
    // Predicated region
    $region28: #{tpu_custom_call.1} parent=1 // pred_check
      _
    $region29: #{tpu_custom_call.1} parent=1 // pred_check_branch
      %51 = sbr.rel (0) target = $region31
    $region30: #{tpu_custom_call.1} parent=1 // pred_region
      %52 = vsyncadd [#allocation2], 16
    $region31: #{tpu_custom_call.1} parent=1 // pred_fallthru
      _
    %s53 = sadd.s32 %s16, 1
    %s54 = sld [smem:[#allocation4 + %s53]]
    %s55 = scalar_lea.vmem %s1, %s54
    %s56 = scalar_lea.vmem [#allocation5], 1
    %s57 = scalar_lea.sflag [#allocation2], 1
    // Predicated region
    $region32: #{tpu_custom_call.1} parent=1 // pred_check
      _
    $region33: #{tpu_custom_call.1} parent=1 // pred_check_branch
      %59 = sbr.rel target = $region35
    $region34: #{tpu_custom_call.1} parent=1 // pred_region
      // Predicated region
      $region47: #{tpu_custom_call.1} parent=34 // pred_check
        _
      $region48: #{tpu_custom_call.1} parent=34 // pred_check_branch
        %75 = sbr.rel (0) target = $region50
      $region49: #{tpu_custom_call.1} parent=34 // pred_region
        %s77 = ssub.s32 2, 1
        loop: start=0, step=1, limit=1
        $region51: #{tpu_custom_call.1} parent=49 // loop_pre_header
          _
        $region52: #{tpu_custom_call.1} parent=49 // loop_header
          %s79 = sphi 0, %s83
          %p80 = scmp.ge.s32.totalorder %s79, 1
          %s84 = sphi %s55, %s55
          %s85 = sphi %s56, %s56
        $region53: #{tpu_custom_call.1} parent=49 // loop_header_branch
          %82 = sbr.rel (%p80) target = $region57
        $region54: #{tpu_custom_call.1} parent=49 // loop_body
          %v86 = vld [vmem:[%s84] sm:%s77]
          %87 = vst [vmem:[%s85] sm:%s77] %v86
        $region55: #{tpu_custom_call.1} parent=49 // loop_footer
          %s83 = sadd.s32 1, %s79
        $region56: #{tpu_custom_call.1} parent=49 // loop_footer_branch
          %78 = sbr.rel target = $region52
        $region57: #{tpu_custom_call.1} parent=49 // loop_exit
          _
      $region50: #{tpu_custom_call.1} parent=34 // pred_fallthru
        _
    $region35: #{tpu_custom_call.1} parent=1 // pred_fallthru
      _
    // Predicated region
    $region36: #{tpu_custom_call.1} parent=1 // pred_check
      _
    $region37: #{tpu_custom_call.1} parent=1 // pred_check_branch
      %61 = sbr.rel (0) target = $region39
    $region38: #{tpu_custom_call.1} parent=1 // pred_region
      %s63 = ssub.s32 2, 1
      loop: start=0, step=1, limit=1
      $region40: #{tpu_custom_call.1} parent=38 // loop_pre_header
        _
      $region41: #{tpu_custom_call.1} parent=38 // loop_header
        %s65 = sphi 0, %s69
        %p66 = scmp.ge.s32.totalorder %s65, 1
        %s70 = sphi %s55, %s55
        %s71 = sphi %s56, %s56
      $region42: #{tpu_custom_call.1} parent=38 // loop_header_branch
        %68 = sbr.rel (%p66) target = $region46
      $region43: #{tpu_custom_call.1} parent=38 // loop_body
        %v72 = vld [vmem:[%s70] sm:%s63]
        %73 = vst [vmem:[%s71] sm:%s63] %v72
      $region44: #{tpu_custom_call.1} parent=38 // loop_footer
        %s69 = sadd.s32 1, %s65
      $region45: #{tpu_custom_call.1} parent=38 // loop_footer_branch
        %64 = sbr.rel target = $region41
      $region46: #{tpu_custom_call.1} parent=38 // loop_exit
        _
    $region39: #{tpu_custom_call.1} parent=1 // pred_fallthru
      _
    // Predicated region
    $region58: #{tpu_custom_call.1} parent=1 // pred_check
      _
    $region59: #{tpu_custom_call.1} parent=1 // pred_check_branch
      %90 = sbr.rel (0) target = $region61
    $region60: #{tpu_custom_call.1} parent=1 // pred_region
      %91 = vsyncadd %s57, 16
    $region61: #{tpu_custom_call.1} parent=1 // pred_fallthru
      _
    %s92 = sadd.s32 %s16, 2
    %s93 = sld [smem:[#allocation4 + %s92]]
    %s94 = scalar_lea.vmem %s1, %s93
    %s95 = scalar_lea.vmem [#allocation5], 2
    %s96 = scalar_lea.sflag [#allocation2], 2
    // Predicated region
    $region62: #{tpu_custom_call.1} parent=1 // pred_check
      _
    $region63: #{tpu_custom_call.1} parent=1 // pred_check_branch
      %98 = sbr.rel target = $region65
    $region64: #{tpu_custom_call.1} parent=1 // pred_region
      // Predicated region
      $region77: #{tpu_custom_call.1} parent=64 // pred_check
        _
      $region78: #{tpu_custom_call.1} parent=64 // pred_check_branch
        %114 = sbr.rel (0) target = $region80
      $region79: #{tpu_custom_call.1} parent=64 // pred_region
        %s116 = ssub.s32 2, 1
        loop: start=0, step=1, limit=1
        $region81: #{tpu_custom_call.1} parent=79 // loop_pre_header
          _
        $region82: #{tpu_custom_call.1} parent=79 // loop_header
          %s118 = sphi 0, %s122
          %p119 = scmp.ge.s32.totalorder %s118, 1
          %s123 = sphi %s94, %s94
          %s124 = sphi %s95, %s95
        $region83: #{tpu_custom_call.1} parent=79 // loop_header_branch
          %121 = sbr.rel (%p119) target = $region87
        $region84: #{tpu_custom_call.1} parent=79 // loop_body
          %v125 = vld [vmem:[%s123] sm:%s116]
          %126 = vst [vmem:[%s124] sm:%s116] %v125
        $region85: #{tpu_custom_call.1} parent=79 // loop_footer
          %s122 = sadd.s32 1, %s118
        $region86: #{tpu_custom_call.1} parent=79 // loop_footer_branch
          %117 = sbr.rel target = $region82
        $region87: #{tpu_custom_call.1} parent=79 // loop_exit
          _
      $region80: #{tpu_custom_call.1} parent=64 // pred_fallthru
        _
    $region65: #{tpu_custom_call.1} parent=1 // pred_fallthru
      _
    // Predicated region
    $region66: #{tpu_custom_call.1} parent=1 // pred_check
      _
    $region67: #{tpu_custom_call.1} parent=1 // pred_check_branch
      %100 = sbr.rel (0) target = $region69
    $region68: #{tpu_custom_call.1} parent=1 // pred_region
      %s102 = ssub.s32 2, 1
      loop: start=0, step=1, limit=1
      $region70: #{tpu_custom_call.1} parent=68 // loop_pre_header
        _
      $region71: #{tpu_custom_call.1} parent=68 // loop_header
        %s104 = sphi 0, %s108
        %p105 = scmp.ge.s32.totalorder %s104, 1
        %s109 = sphi %s94, %s94
        %s110 = sphi %s95, %s95
      $region72: #{tpu_custom_call.1} parent=68 // loop_header_branch
        %107 = sbr.rel (%p105) target = $region76
      $region73: #{tpu_custom_call.1} parent=68 // loop_body
        %v111 = vld [vmem:[%s109] sm:%s102]
        %112 = vst [vmem:[%s110] sm:%s102] %v111
      $region74: #{tpu_custom_call.1} parent=68 // loop_footer
        %s108 = sadd.s32 1, %s104
      $region75: #{tpu_custom_call.1} parent=68 // loop_footer_branch
        %103 = sbr.rel target = $region71
      $region76: #{tpu_custom_call.1} parent=68 // loop_exit
        _
    $region69: #{tpu_custom_call.1} parent=1 // pred_fallthru
      _
    // Predicated region
    $region88: #{tpu_custom_call.1} parent=1 // pred_check
      _
    $region89: #{tpu_custom_call.1} parent=1 // pred_check_branch
      %129 = sbr.rel (0) target = $region91
    $region90: #{tpu_custom_call.1} parent=1 // pred_region
      %130 = vsyncadd %s96, 16
    $region91: #{tpu_custom_call.1} parent=1 // pred_fallthru
      _
    %s131 = sadd.s32 %s16, 3
    %s132 = sld [smem:[#allocation4 + %s131]]
    %s133 = scalar_lea.vmem %s1, %s132
    %s134 = scalar_lea.vmem [#allocation5], 3
    %s135 = scalar_lea.sflag [#allocation2], 3
    // Predicated region
    $region92: #{tpu_custom_call.1} parent=1 // pred_check
      _
    $region93: #{tpu_custom_call.1} parent=1 // pred_check_branch
      %137 = sbr.rel target = $region95
    $region94: #{tpu_custom_call.1} parent=1 // pred_region
      // Predicated region
      $region107: #{tpu_custom_call.1} parent=94 // pred_check
        _
      $region108: #{tpu_custom_call.1} parent=94 // pred_check_branch
        %153 = sbr.rel (0) target = $region110
      $region109: #{tpu_custom_call.1} parent=94 // pred_region
        %s155 = ssub.s32 2, 1
        loop: start=0, step=1, limit=1
        $region111: #{tpu_custom_call.1} parent=109 // loop_pre_header
          _
        $region112: #{tpu_custom_call.1} parent=109 // loop_header
          %s157 = sphi 0, %s161
          %p158 = scmp.ge.s32.totalorder %s157, 1
          %s162 = sphi %s133, %s133
          %s163 = sphi %s134, %s134
        $region113: #{tpu_custom_call.1} parent=109 // loop_header_branch
          %160 = sbr.rel (%p158) target = $region117
        $region114: #{tpu_custom_call.1} parent=109 // loop_body
          %v164 = vld [vmem:[%s162] sm:%s155]
          %165 = vst [vmem:[%s163] sm:%s155] %v164
        $region115: #{tpu_custom_call.1} parent=109 // loop_footer
          %s161 = sadd.s32 1, %s157
        $region116: #{tpu_custom_call.1} parent=109 // loop_footer_branch
          %156 = sbr.rel target = $region112
        $region117: #{tpu_custom_call.1} parent=109 // loop_exit
          _
      $region110: #{tpu_custom_call.1} parent=94 // pred_fallthru
        _
    $region95: #{tpu_custom_call.1} parent=1 // pred_fallthru
      _
    // Predicated region
    $region96: #{tpu_custom_call.1} parent=1 // pred_check
      _
    $region97: #{tpu_custom_call.1} parent=1 // pred_check_branch
      %139 = sbr.rel (0) target = $region99
    $region98: #{tpu_custom_call.1} parent=1 // pred_region
      %s141 = ssub.s32 2, 1
      loop: start=0, step=1, limit=1
      $region100: #{tpu_custom_call.1} parent=98 // loop_pre_header
        _
      $region101: #{tpu_custom_call.1} parent=98 // loop_header
        %s143 = sphi 0, %s147
        %p144 = scmp.ge.s32.totalorder %s143, 1
        %s148 = sphi %s133, %s133
        %s149 = sphi %s134, %s134
      $region102: #{tpu_custom_call.1} parent=98 // loop_header_branch
        %146 = sbr.rel (%p144) target = $region106
      $region103: #{tpu_custom_call.1} parent=98 // loop_body
        %v150 = vld [vmem:[%s148] sm:%s141]
        %151 = vst [vmem:[%s149] sm:%s141] %v150
      $region104: #{tpu_custom_call.1} parent=98 // loop_footer
        %s147 = sadd.s32 1, %s143
      $region105: #{tpu_custom_call.1} parent=98 // loop_footer_branch
        %142 = sbr.rel target = $region101
      $region106: #{tpu_custom_call.1} parent=98 // loop_exit
        _
    $region99: #{tpu_custom_call.1} parent=1 // pred_fallthru
      _
    // Predicated region
    $region118: #{tpu_custom_call.1} parent=1 // pred_check
      _
    $region119: #{tpu_custom_call.1} parent=1 // pred_check_branch
      %168 = sbr.rel (0) target = $region121
    $region120: #{tpu_custom_call.1} parent=1 // pred_region
      %169 = vsyncadd %s135, 16
    $region121: #{tpu_custom_call.1} parent=1 // pred_fallthru
      _
    %s170 = sadd.s32 %s16, 4
    %s171 = sld [smem:[#allocation4 + %s170]]
    %s172 = scalar_lea.vmem %s1, %s171
    %s173 = scalar_lea.vmem [#allocation5], 4
    %s174 = scalar_lea.sflag [#allocation2], 4
    // Predicated region
    $region122: #{tpu_custom_call.1} parent=1 // pred_check
      _
    $region123: #{tpu_custom_call.1} parent=1 // pred_check_branch
      %176 = sbr.rel target = $region125
    $region124: #{tpu_custom_call.1} parent=1 // pred_region
      // Predicated region
      $region137: #{tpu_custom_call.1} parent=124 // pred_check
        _
      $region138: #{tpu_custom_call.1} parent=124 // pred_check_branch
        %192 = sbr.rel (0) target = $region140
      $region139: #{tpu_custom_call.1} parent=124 // pred_region
        %s194 = ssub.s32 2, 1
        loop: start=0, step=1, limit=1
        $region141: #{tpu_custom_call.1} parent=139 // loop_pre_header
          _
        $region142: #{tpu_custom_call.1} parent=139 // loop_header
          %s196 = sphi 0, %s200
          %p197 = scmp.ge.s32.totalorder %s196, 1
          %s201 = sphi %s172, %s172
          %s202 = sphi %s173, %s173
        $region143: #{tpu_custom_call.1} parent=139 // loop_header_branch
          %199 = sbr.rel (%p197) target = $region147
        $region144: #{tpu_custom_call.1} parent=139 // loop_body
          %v203 = vld [vmem:[%s201] sm:%s194]
          %204 = vst [vmem:[%s202] sm:%s194] %v203
        $region145: #{tpu_custom_call.1} parent=139 // loop_footer
          %s200 = sadd.s32 1, %s196
        $region146: #{tpu_custom_call.1} parent=139 // loop_footer_branch
          %195 = sbr.rel target = $region142
        $region147: #{tpu_custom_call.1} parent=139 // loop_exit
          _
      $region140: #{tpu_custom_call.1} parent=124 // pred_fallthru
        _
    $region125: #{tpu_custom_call.1} parent=1 // pred_fallthru
      _
    // Predicated region
    $region126: #{tpu_custom_call.1} parent=1 // pred_check
      _
    $region127: #{tpu_custom_call.1} parent=1 // pred_check_branch
      %178 = sbr.rel (0) target = $region129
    $region128: #{tpu_custom_call.1} parent=1 // pred_region
      %s180 = ssub.s32 2, 1
      loop: start=0, step=1, limit=1
      $region130: #{tpu_custom_call.1} parent=128 // loop_pre_header
        _
      $region131: #{tpu_custom_call.1} parent=128 // loop_header
        %s182 = sphi 0, %s186
        %p183 = scmp.ge.s32.totalorder %s182, 1
        %s187 = sphi %s172, %s172
        %s188 = sphi %s173, %s173
      $region132: #{tpu_custom_call.1} parent=128 // loop_header_branch
        %185 = sbr.rel (%p183) target = $region136
      $region133: #{tpu_custom_call.1} parent=128 // loop_body
        %v189 = vld [vmem:[%s187] sm:%s180]
        %190 = vst [vmem:[%s188] sm:%s180] %v189
      $region134: #{tpu_custom_call.1} parent=128 // loop_footer
        %s186 = sadd.s32 1, %s182
      $region135: #{tpu_custom_call.1} parent=128 // loop_footer_branch
        %181 = sbr.rel target = $region131
      $region136: #{tpu_custom_call.1} parent=128 // loop_exit
        _
    $region129: #{tpu_custom_call.1} parent=1 // pred_fallthru
      _
    // Predicated region
    $region148: #{tpu_custom_call.1} parent=1 // pred_check
      _
    $region149: #{tpu_custom_call.1} parent=1 // pred_check_branch
      %207 = sbr.rel (0) target = $region151
    $region150: #{tpu_custom_call.1} parent=1 // pred_region
      %208 = vsyncadd %s174, 16
    $region151: #{tpu_custom_call.1} parent=1 // pred_fallthru
      _
    %s209 = sadd.s32 %s16, 5
    %s210 = sld [smem:[#allocation4 + %s209]]
    %s211 = scalar_lea.vmem %s1, %s210
    %s212 = scalar_lea.vmem [#allocation5], 5
    %s213 = scalar_lea.sflag [#allocation2], 5
    // Predicated region
    $region152: #{tpu_custom_call.1} parent=1 // pred_check
      _
    $region153: #{tpu_custom_call.1} parent=1 // pred_check_branch
      %215 = sbr.rel target = $region155
    $region154: #{tpu_custom_call.1} parent=1 // pred_region
      // Predicated region
      $region167: #{tpu_custom_call.1} parent=154 // pred_check
        _
      $region168: #{tpu_custom_call.1} parent=154 // pred_check_branch
        %231 = sbr.rel (0) target = $region170
      $region169: #{tpu_custom_call.1} parent=154 // pred_region
        %s233 = ssub.s32 2, 1
        loop: start=0, step=1, limit=1
        $region171: #{tpu_custom_call.1} parent=169 // loop_pre_header
          _
        $region172: #{tpu_custom_call.1} parent=169 // loop_header
          %s235 = sphi 0, %s239
          %p236 = scmp.ge.s32.totalorder %s235, 1
          %s240 = sphi %s211, %s211
          %s241 = sphi %s212, %s212
        $region173: #{tpu_custom_call.1} parent=169 // loop_header_branch
          %238 = sbr.rel (%p236) target = $region177
        $region174: #{tpu_custom_call.1} parent=169 // loop_body
          %v242 = vld [vmem:[%s240] sm:%s233]
          %243 = vst [vmem:[%s241] sm:%s233] %v242
        $region175: #{tpu_custom_call.1} parent=169 // loop_footer
          %s239 = sadd.s32 1, %s235
        $region176: #{tpu_custom_call.1} parent=169 // loop_footer_branch
          %234 = sbr.rel target = $region172
        $region177: #{tpu_custom_call.1} parent=169 // loop_exit
          _
      $region170: #{tpu_custom_call.1} parent=154 // pred_fallthru
        _
    $region155: #{tpu_custom_call.1} parent=1 // pred_fallthru
      _
    // Predicated region
    $region156: #{tpu_custom_call.1} parent=1 // pred_check
      _
    $region157: #{tpu_custom_call.1} parent=1 // pred_check_branch
      %217 = sbr.rel (0) target = $region159
    $region158: #{tpu_custom_call.1} parent=1 // pred_region
      %s219 = ssub.s32 2, 1
      loop: start=0, step=1, limit=1
      $region160: #{tpu_custom_call.1} parent=158 // loop_pre_header
        _
      $region161: #{tpu_custom_call.1} parent=158 // loop_header
        %s221 = sphi 0, %s225
        %p222 = scmp.ge.s32.totalorder %s221, 1
        %s226 = sphi %s211, %s211
        %s227 = sphi %s212, %s212
      $region162: #{tpu_custom_call.1} parent=158 // loop_header_branch
        %224 = sbr.rel (%p222) target = $region166
      $region163: #{tpu_custom_call.1} parent=158 // loop_body
        %v228 = vld [vmem:[%s226] sm:%s219]
        %229 = vst [vmem:[%s227] sm:%s219] %v228
      $region164: #{tpu_custom_call.1} parent=158 // loop_footer
        %s225 = sadd.s32 1, %s221
      $region165: #{tpu_custom_call.1} parent=158 // loop_footer_branch
        %220 = sbr.rel target = $region161
      $region166: #{tpu_custom_call.1} parent=158 // loop_exit
        _
    $region159: #{tpu_custom_call.1} parent=1 // pred_fallthru
      _
    // Predicated region
    $region178: #{tpu_custom_call.1} parent=1 // pred_check
      _
    $region179: #{tpu_custom_call.1} parent=1 // pred_check_branch
      %246 = sbr.rel (0) target = $region181
    $region180: #{tpu_custom_call.1} parent=1 // pred_region
      %247 = vsyncadd %s213, 16
    $region181: #{tpu_custom_call.1} parent=1 // pred_fallthru
      _
    %s248 = sadd.s32 %s16, 6
    %s249 = sld [smem:[#allocation4 + %s248]]
    %s250 = scalar_lea.vmem %s1, %s249
    %s251 = scalar_lea.vmem [#allocation5], 6
    %s252 = scalar_lea.sflag [#allocation2], 6
    // Predicated region
    $region182: #{tpu_custom_call.1} parent=1 // pred_check
      _
    $region183: #{tpu_custom_call.1} parent=1 // pred_check_branch
      %254 = sbr.rel target = $region185
    $region184: #{tpu_custom_call.1} parent=1 // pred_region
      // Predicated region
      $region197: #{tpu_custom_call.1} parent=184 // pred_check
        _
      $region198: #{tpu_custom_call.1} parent=184 // pred_check_branch
        %270 = sbr.rel (0) target = $region200
      $region199: #{tpu_custom_call.1} parent=184 // pred_region
        %s272 = ssub.s32 2, 1
        loop: start=0, step=1, limit=1
        $region201: #{tpu_custom_call.1} parent=199 // loop_pre_header
          _
        $region202: #{tpu_custom_call.1} parent=199 // loop_header
          %s274 = sphi 0, %s278
          %p275 = scmp.ge.s32.totalorder %s274, 1
          %s279 = sphi %s250, %s250
          %s280 = sphi %s251, %s251
        $region203: #{tpu_custom_call.1} parent=199 // loop_header_branch
          %277 = sbr.rel (%p275) target = $region207
        $region204: #{tpu_custom_call.1} parent=199 // loop_body
          %v281 = vld [vmem:[%s279] sm:%s272]
          %282 = vst [vmem:[%s280] sm:%s272] %v281
        $region205: #{tpu_custom_call.1} parent=199 // loop_footer
          %s278 = sadd.s32 1, %s274
        $region206: #{tpu_custom_call.1} parent=199 // loop_footer_branch
          %273 = sbr.rel target = $region202
        $region207: #{tpu_custom_call.1} parent=199 // loop_exit
          _
      $region200: #{tpu_custom_call.1} parent=184 // pred_fallthru
        _
    $region185: #{tpu_custom_call.1} parent=1 // pred_fallthru
      _
    // Predicated region
    $region186: #{tpu_custom_call.1} parent=1 // pred_check
      _
    $region187: #{tpu_custom_call.1} parent=1 // pred_check_branch
      %256 = sbr.rel (0) target = $region189
    $region188: #{tpu_custom_call.1} parent=1 // pred_region
      %s258 = ssub.s32 2, 1
      loop: start=0, step=1, limit=1
      $region190: #{tpu_custom_call.1} parent=188 // loop_pre_header
        _
      $region191: #{tpu_custom_call.1} parent=188 // loop_header
        %s260 = sphi 0, %s264
        %p261 = scmp.ge.s32.totalorder %s260, 1
        %s265 = sphi %s250, %s250
        %s266 = sphi %s251, %s251
      $region192: #{tpu_custom_call.1} parent=188 // loop_header_branch
        %263 = sbr.rel (%p261) target = $region196
      $region193: #{tpu_custom_call.1} parent=188 // loop_body
        %v267 = vld [vmem:[%s265] sm:%s258]
        %268 = vst [vmem:[%s266] sm:%s258] %v267
      $region194: #{tpu_custom_call.1} parent=188 // loop_footer
        %s264 = sadd.s32 1, %s260
      $region195: #{tpu_custom_call.1} parent=188 // loop_footer_branch
        %259 = sbr.rel target = $region191
      $region196: #{tpu_custom_call.1} parent=188 // loop_exit
        _
    $region189: #{tpu_custom_call.1} parent=1 // pred_fallthru
      _
    // Predicated region
    $region208: #{tpu_custom_call.1} parent=1 // pred_check
      _
    $region209: #{tpu_custom_call.1} parent=1 // pred_check_branch
      %285 = sbr.rel (0) target = $region211
    $region210: #{tpu_custom_call.1} parent=1 // pred_region
      %286 = vsyncadd %s252, 16
    $region211: #{tpu_custom_call.1} parent=1 // pred_fallthru
      _
    %s287 = sadd.s32 %s16, 7
    %s288 = sld [smem:[#allocation4 + %s287]]
    %s289 = scalar_lea.vmem %s1, %s288
    %s290 = scalar_lea.vmem [#allocation5], 7
    %s291 = scalar_lea.sflag [#allocation2], 7
    // Predicated region
    $region212: #{tpu_custom_call.1} parent=1 // pred_check
      _
    $region213: #{tpu_custom_call.1} parent=1 // pred_check_branch
      %293 = sbr.rel target = $region215
    $region214: #{tpu_custom_call.1} parent=1 // pred_region
      // Predicated region
      $region227: #{tpu_custom_call.1} parent=214 // pred_check
        _
      $region228: #{tpu_custom_call.1} parent=214 // pred_check_branch
        %309 = sbr.rel (0) target = $region230
      $region229: #{tpu_custom_call.1} parent=214 // pred_region
        %s311 = ssub.s32 2, 1
        loop: start=0, step=1, limit=1
        $region231: #{tpu_custom_call.1} parent=229 // loop_pre_header
          _
        $region232: #{tpu_custom_call.1} parent=229 // loop_header
          %s313 = sphi 0, %s317
          %p314 = scmp.ge.s32.totalorder %s313, 1
          %s318 = sphi %s289, %s289
          %s319 = sphi %s290, %s290
        $region233: #{tpu_custom_call.1} parent=229 // loop_header_branch
          %316 = sbr.rel (%p314) target = $region237
        $region234: #{tpu_custom_call.1} parent=229 // loop_body
          %v320 = vld [vmem:[%s318] sm:%s311]
          %321 = vst [vmem:[%s319] sm:%s311] %v320
        $region235: #{tpu_custom_call.1} parent=229 // loop_footer
          %s317 = sadd.s32 1, %s313
        $region236: #{tpu_custom_call.1} parent=229 // loop_footer_branch
          %312 = sbr.rel target = $region232
        $region237: #{tpu_custom_call.1} parent=229 // loop_exit
          _
      $region230: #{tpu_custom_call.1} parent=214 // pred_fallthru
        _
    $region215: #{tpu_custom_call.1} parent=1 // pred_fallthru
      _
    // Predicated region
    $region216: #{tpu_custom_call.1} parent=1 // pred_check
      _
    $region217: #{tpu_custom_call.1} parent=1 // pred_check_branch
      %295 = sbr.rel (0) target = $region219
    $region218: #{tpu_custom_call.1} parent=1 // pred_region
      %s297 = ssub.s32 2, 1
      loop: start=0, step=1, limit=1
      $region220: #{tpu_custom_call.1} parent=218 // loop_pre_header
        _
      $region221: #{tpu_custom_call.1} parent=218 // loop_header
        %s299 = sphi 0, %s303
        %p300 = scmp.ge.s32.totalorder %s299, 1
        %s304 = sphi %s289, %s289
        %s305 = sphi %s290, %s290
      $region222: #{tpu_custom_call.1} parent=218 // loop_header_branch
        %302 = sbr.rel (%p300) target = $region226
      $region223: #{tpu_custom_call.1} parent=218 // loop_body
        %v306 = vld [vmem:[%s304] sm:%s297]
        %307 = vst [vmem:[%s305] sm:%s297] %v306
      $region224: #{tpu_custom_call.1} parent=218 // loop_footer
        %s303 = sadd.s32 1, %s299
      $region225: #{tpu_custom_call.1} parent=218 // loop_footer_branch
        %298 = sbr.rel target = $region221
      $region226: #{tpu_custom_call.1} parent=218 // loop_exit
        _
    $region219: #{tpu_custom_call.1} parent=1 // pred_fallthru
      _
    // Predicated region
    $region238: #{tpu_custom_call.1} parent=1 // pred_check
      _
    $region239: #{tpu_custom_call.1} parent=1 // pred_check_branch
      %324 = sbr.rel (0) target = $region241
    $region240: #{tpu_custom_call.1} parent=1 // pred_region
      %325 = vsyncadd %s291, 16
    $region241: #{tpu_custom_call.1} parent=1 // pred_fallthru
      _
    %s326 = sadd.s32 %s16, 8
    %s327 = sld [smem:[#allocation4 + %s326]]
    %s328 = scalar_lea.vmem %s1, %s327
    %s329 = scalar_lea.vmem [#allocation5], 8
    %s330 = scalar_lea.sflag [#allocation2], 8
    // Predicated region
    $region242: #{tpu_custom_call.1} parent=1 // pred_check
      _
    $region243: #{tpu_custom_call.1} parent=1 // pred_check_branch
      %332 = sbr.rel target = $region245
    $region244: #{tpu_custom_call.1} parent=1 // pred_region
      // Predicated region
      $region257: #{tpu_custom_call.1} parent=244 // pred_check
        _
      $region258: #{tpu_custom_call.1} parent=244 // pred_check_branch
        %348 = sbr.rel (0) target = $region260
      $region259: #{tpu_custom_call.1} parent=244 // pred_region
        %s350 = ssub.s32 2, 1
        loop: start=0, step=1, limit=1
        $region261: #{tpu_custom_call.1} parent=259 // loop_pre_header
          _
        $region262: #{tpu_custom_call.1} parent=259 // loop_header
          %s352 = sphi 0, %s356
          %p353 = scmp.ge.s32.totalorder %s352, 1
          %s357 = sphi %s328, %s328
          %s358 = sphi %s329, %s329
        $region263: #{tpu_custom_call.1} parent=259 // loop_header_branch
          %355 = sbr.rel (%p353) target = $region267
        $region264: #{tpu_custom_call.1} parent=259 // loop_body
          %v359 = vld [vmem:[%s357] sm:%s350]
          %360 = vst [vmem:[%s358] sm:%s350] %v359
        $region265: #{tpu_custom_call.1} parent=259 // loop_footer
          %s356 = sadd.s32 1, %s352
        $region266: #{tpu_custom_call.1} parent=259 // loop_footer_branch
          %351 = sbr.rel target = $region262
        $region267: #{tpu_custom_call.1} parent=259 // loop_exit
          _
      $region260: #{tpu_custom_call.1} parent=244 // pred_fallthru
        _
    $region245: #{tpu_custom_call.1} parent=1 // pred_fallthru
      _
    // Predicated region
    $region246: #{tpu_custom_call.1} parent=1 // pred_check
      _
    $region247: #{tpu_custom_call.1} parent=1 // pred_check_branch
      %334 = sbr.rel (0) target = $region249
    $region248: #{tpu_custom_call.1} parent=1 // pred_region
      %s336 = ssub.s32 2, 1
      loop: start=0, step=1, limit=1
      $region250: #{tpu_custom_call.1} parent=248 // loop_pre_header
        _
      $region251: #{tpu_custom_call.1} parent=248 // loop_header
        %s338 = sphi 0, %s342
        %p339 = scmp.ge.s32.totalorder %s338, 1
        %s343 = sphi %s328, %s328
        %s344 = sphi %s329, %s329
      $region252: #{tpu_custom_call.1} parent=248 // loop_header_branch
        %341 = sbr.rel (%p339) target = $region256
      $region253: #{tpu_custom_call.1} parent=248 // loop_body
        %v345 = vld [vmem:[%s343] sm:%s336]
        %346 = vst [vmem:[%s344] sm:%s336] %v345
      $region254: #{tpu_custom_call.1} parent=248 // loop_footer
        %s342 = sadd.s32 1, %s338
      $region255: #{tpu_custom_call.1} parent=248 // loop_footer_branch
        %337 = sbr.rel target = $region251
      $region256: #{tpu_custom_call.1} parent=248 // loop_exit
        _
    $region249: #{tpu_custom_call.1} parent=1 // pred_fallthru
      _
    // Predicated region
    $region268: #{tpu_custom_call.1} parent=1 // pred_check
      _
    $region269: #{tpu_custom_call.1} parent=1 // pred_check_branch
      %363 = sbr.rel (0) target = $region271
    $region270: #{tpu_custom_call.1} parent=1 // pred_region
      %364 = vsyncadd %s330, 16
    $region271: #{tpu_custom_call.1} parent=1 // pred_fallthru
      _
    %s365 = sadd.s32 %s16, 9
    %s366 = sld [smem:[#allocation4 + %s365]]
    %s367 = scalar_lea.vmem %s1, %s366
    %s368 = scalar_lea.vmem [#allocation5], 9
    %s369 = scalar_lea.sflag [#allocation2], 9
    // Predicated region
    $region272: #{tpu_custom_call.1} parent=1 // pred_check
      _
    $region273: #{tpu_custom_call.1} parent=1 // pred_check_branch
      %371 = sbr.rel target = $region275
    $region274: #{tpu_custom_call.1} parent=1 // pred_region
      // Predicated region
      $region287: #{tpu_custom_call.1} parent=274 // pred_check
        _
      $region288: #{tpu_custom_call.1} parent=274 // pred_check_branch
        %387 = sbr.rel (0) target = $region290
      $region289: #{tpu_custom_call.1} parent=274 // pred_region
        %s389 = ssub.s32 2, 1
        loop: start=0, step=1, limit=1
        $region291: #{tpu_custom_call.1} parent=289 // loop_pre_header
          _
        $region292: #{tpu_custom_call.1} parent=289 // loop_header
          %s391 = sphi 0, %s395
          %p392 = scmp.ge.s32.totalorder %s391, 1
          %s396 = sphi %s367, %s367
          %s397 = sphi %s368, %s368
        $region293: #{tpu_custom_call.1} parent=289 // loop_header_branch
          %394 = sbr.rel (%p392) target = $region297
        $region294: #{tpu_custom_call.1} parent=289 // loop_body
          %v398 = vld [vmem:[%s396] sm:%s389]
          %399 = vst [vmem:[%s397] sm:%s389] %v398
        $region295: #{tpu_custom_call.1} parent=289 // loop_footer
          %s395 = sadd.s32 1, %s391
        $region296: #{tpu_custom_call.1} parent=289 // loop_footer_branch
          %390 = sbr.rel target = $region292
        $region297: #{tpu_custom_call.1} parent=289 // loop_exit
          _
      $region290: #{tpu_custom_call.1} parent=274 // pred_fallthru
        _
    $region275: #{tpu_custom_call.1} parent=1 // pred_fallthru
      _
    // Predicated region
    $region276: #{tpu_custom_call.1} parent=1 // pred_check
      _
    $region277: #{tpu_custom_call.1} parent=1 // pred_check_branch
      %373 = sbr.rel (0) target = $region279
    $region278: #{tpu_custom_call.1} parent=1 // pred_region
      %s375 = ssub.s32 2, 1
      loop: start=0, step=1, limit=1
      $region280: #{tpu_custom_call.1} parent=278 // loop_pre_header
        _
      $region281: #{tpu_custom_call.1} parent=278 // loop_header
        %s377 = sphi 0, %s381
        %p378 = scmp.ge.s32.totalorder %s377, 1
        %s382 = sphi %s367, %s367
        %s383 = sphi %s368, %s368
      $region282: #{tpu_custom_call.1} parent=278 // loop_header_branch
        %380 = sbr.rel (%p378) target = $region286
      $region283: #{tpu_custom_call.1} parent=278 // loop_body
        %v384 = vld [vmem:[%s382] sm:%s375]
        %385 = vst [vmem:[%s383] sm:%s375] %v384
      $region284: #{tpu_custom_call.1} parent=278 // loop_footer
        %s381 = sadd.s32 1, %s377
      $region285: #{tpu_custom_call.1} parent=278 // loop_footer_branch
        %376 = sbr.rel target = $region281
      $region286: #{tpu_custom_call.1} parent=278 // loop_exit
        _
    $region279: #{tpu_custom_call.1} parent=1 // pred_fallthru
      _
    // Predicated region
    $region298: #{tpu_custom_call.1} parent=1 // pred_check
      _
    $region299: #{tpu_custom_call.1} parent=1 // pred_check_branch
      %402 = sbr.rel (0) target = $region301
    $region300: #{tpu_custom_call.1} parent=1 // pred_region
      %403 = vsyncadd %s369, 16
    $region301: #{tpu_custom_call.1} parent=1 // pred_fallthru
      _
    %s404 = sadd.s32 %s16, 10
    %s405 = sld [smem:[#allocation4 + %s404]]
    %s406 = scalar_lea.vmem %s1, %s405
    %s407 = scalar_lea.vmem [#allocation5], 10
    %s408 = scalar_lea.sflag [#allocation2], 10
    // Predicated region
    $region302: #{tpu_custom_call.1} parent=1 // pred_check
      _
    $region303: #{tpu_custom_call.1} parent=1 // pred_check_branch
      %410 = sbr.rel target = $region305
    $region304: #{tpu_custom_call.1} parent=1 // pred_region
      // Predicated region
      $region317: #{tpu_custom_call.1} parent=304 // pred_check
        _
      $region318: #{tpu_custom_call.1} parent=304 // pred_check_branch
        %426 = sbr.rel (0) target = $region320
      $region319: #{tpu_custom_call.1} parent=304 // pred_region
        %s428 = ssub.s32 2, 1
        loop: start=0, step=1, limit=1
        $region321: #{tpu_custom_call.1} parent=319 // loop_pre_header
          _
        $region322: #{tpu_custom_call.1} parent=319 // loop_header
          %s430 = sphi 0, %s434
          %p431 = scmp.ge.s32.totalorder %s430, 1
          %s435 = sphi %s406, %s406
          %s436 = sphi %s407, %s407
        $region323: #{tpu_custom_call.1} parent=319 // loop_header_branch
          %433 = sbr.rel (%p431) target = $region327
        $region324: #{tpu_custom_call.1} parent=319 // loop_body
          %v437 = vld [vmem:[%s435] sm:%s428]
          %438 = vst [vmem:[%s436] sm:%s428] %v437
        $region325: #{tpu_custom_call.1} parent=319 // loop_footer
          %s434 = sadd.s32 1, %s430
        $region326: #{tpu_custom_call.1} parent=319 // loop_footer_branch
          %429 = sbr.rel target = $region322
        $region327: #{tpu_custom_call.1} parent=319 // loop_exit
          _
      $region320: #{tpu_custom_call.1} parent=304 // pred_fallthru
        _
    $region305: #{tpu_custom_call.1} parent=1 // pred_fallthru
      _
    // Predicated region
    $region306: #{tpu_custom_call.1} parent=1 // pred_check
      _
    $region307: #{tpu_custom_call.1} parent=1 // pred_check_branch
      %412 = sbr.rel (0) target = $region309
    $region308: #{tpu_custom_call.1} parent=1 // pred_region
      %s414 = ssub.s32 2, 1
      loop: start=0, step=1, limit=1
      $region310: #{tpu_custom_call.1} parent=308 // loop_pre_header
        _
      $region311: #{tpu_custom_call.1} parent=308 // loop_header
        %s416 = sphi 0, %s420
        %p417 = scmp.ge.s32.totalorder %s416, 1
        %s421 = sphi %s406, %s406
        %s422 = sphi %s407, %s407
      $region312: #{tpu_custom_call.1} parent=308 // loop_header_branch
        %419 = sbr.rel (%p417) target = $region316
      $region313: #{tpu_custom_call.1} parent=308 // loop_body
        %v423 = vld [vmem:[%s421] sm:%s414]
        %424 = vst [vmem:[%s422] sm:%s414] %v423
      $region314: #{tpu_custom_call.1} parent=308 // loop_footer
        %s420 = sadd.s32 1, %s416
      $region315: #{tpu_custom_call.1} parent=308 // loop_footer_branch
        %415 = sbr.rel target = $region311
      $region316: #{tpu_custom_call.1} parent=308 // loop_exit
        _
    $region309: #{tpu_custom_call.1} parent=1 // pred_fallthru
      _
    // Predicated region
    $region328: #{tpu_custom_call.1} parent=1 // pred_check
      _
    $region329: #{tpu_custom_call.1} parent=1 // pred_check_branch
      %441 = sbr.rel (0) target = $region331
    $region330: #{tpu_custom_call.1} parent=1 // pred_region
      %442 = vsyncadd %s408, 16
    $region331: #{tpu_custom_call.1} parent=1 // pred_fallthru
      _
    %s443 = sadd.s32 %s16, 11
    %s444 = sld [smem:[#allocation4 + %s443]]
    %s445 = scalar_lea.vmem %s1, %s444
    %s446 = scalar_lea.vmem [#allocation5], 11
    %s447 = scalar_lea.sflag [#allocation2], 11
    // Predicated region
    $region332: #{tpu_custom_call.1} parent=1 // pred_check
      _
    $region333: #{tpu_custom_call.1} parent=1 // pred_check_branch
      %449 = sbr.rel target = $region335
    $region334: #{tpu_custom_call.1} parent=1 // pred_region
      // Predicated region
      $region347: #{tpu_custom_call.1} parent=334 // pred_check
        _
      $region348: #{tpu_custom_call.1} parent=334 // pred_check_branch
        %465 = sbr.rel (0) target = $region350
      $region349: #{tpu_custom_call.1} parent=334 // pred_region
        %s467 = ssub.s32 2, 1
        loop: start=0, step=1, limit=1
        $region351: #{tpu_custom_call.1} parent=349 // loop_pre_header
          _
        $region352: #{tpu_custom_call.1} parent=349 // loop_header
          %s469 = sphi 0, %s473
          %p470 = scmp.ge.s32.totalorder %s469, 1
          %s474 = sphi %s445, %s445
          %s475 = sphi %s446, %s446
        $region353: #{tpu_custom_call.1} parent=349 // loop_header_branch
          %472 = sbr.rel (%p470) target = $region357
        $region354: #{tpu_custom_call.1} parent=349 // loop_body
          %v476 = vld [vmem:[%s474] sm:%s467]
          %477 = vst [vmem:[%s475] sm:%s467] %v476
        $region355: #{tpu_custom_call.1} parent=349 // loop_footer
          %s473 = sadd.s32 1, %s469
        $region356: #{tpu_custom_call.1} parent=349 // loop_footer_branch
          %468 = sbr.rel target = $region352
        $region357: #{tpu_custom_call.1} parent=349 // loop_exit
          _
      $region350: #{tpu_custom_call.1} parent=334 // pred_fallthru
        _
    $region335: #{tpu_custom_call.1} parent=1 // pred_fallthru
      _
    // Predicated region
    $region336: #{tpu_custom_call.1} parent=1 // pred_check
      _
    $region337: #{tpu_custom_call.1} parent=1 // pred_check_branch
      %451 = sbr.rel (0) target = $region339
    $region338: #{tpu_custom_call.1} parent=1 // pred_region
      %s453 = ssub.s32 2, 1
      loop: start=0, step=1, limit=1
      $region340: #{tpu_custom_call.1} parent=338 // loop_pre_header
        _
      $region341: #{tpu_custom_call.1} parent=338 // loop_header
        %s455 = sphi 0, %s459
        %p456 = scmp.ge.s32.totalorder %s455, 1
        %s460 = sphi %s445, %s445
        %s461 = sphi %s446, %s446
      $region342: #{tpu_custom_call.1} parent=338 // loop_header_branch
        %458 = sbr.rel (%p456) target = $region346
      $region343: #{tpu_custom_call.1} parent=338 // loop_body
        %v462 = vld [vmem:[%s460] sm:%s453]
        %463 = vst [vmem:[%s461] sm:%s453] %v462
      $region344: #{tpu_custom_call.1} parent=338 // loop_footer
        %s459 = sadd.s32 1, %s455
      $region345: #{tpu_custom_call.1} parent=338 // loop_footer_branch
        %454 = sbr.rel target = $region341
      $region346: #{tpu_custom_call.1} parent=338 // loop_exit
        _
    $region339: #{tpu_custom_call.1} parent=1 // pred_fallthru
      _
    // Predicated region
    $region358: #{tpu_custom_call.1} parent=1 // pred_check
      _
    $region359: #{tpu_custom_call.1} parent=1 // pred_check_branch
      %480 = sbr.rel (0) target = $region361
    $region360: #{tpu_custom_call.1} parent=1 // pred_region
      %481 = vsyncadd %s447, 16
    $region361: #{tpu_custom_call.1} parent=1 // pred_fallthru
      _
    %s482 = sadd.s32 %s16, 12
    %s483 = sld [smem:[#allocation4 + %s482]]
    %s484 = scalar_lea.vmem %s1, %s483
    %s485 = scalar_lea.vmem [#allocation5], 12
    %s486 = scalar_lea.sflag [#allocation2], 12
    // Predicated region
    $region362: #{tpu_custom_call.1} parent=1 // pred_check
      _
    $region363: #{tpu_custom_call.1} parent=1 // pred_check_branch
      %488 = sbr.rel target = $region365
    $region364: #{tpu_custom_call.1} parent=1 // pred_region
      // Predicated region
      $region377: #{tpu_custom_call.1} parent=364 // pred_check
        _
      $region378: #{tpu_custom_call.1} parent=364 // pred_check_branch
        %504 = sbr.rel (0) target = $region380
      $region379: #{tpu_custom_call.1} parent=364 // pred_region
        %s506 = ssub.s32 2, 1
        loop: start=0, step=1, limit=1
        $region381: #{tpu_custom_call.1} parent=379 // loop_pre_header
          _
        $region382: #{tpu_custom_call.1} parent=379 // loop_header
          %s508 = sphi 0, %s512
          %p509 = scmp.ge.s32.totalorder %s508, 1
          %s513 = sphi %s484, %s484
          %s514 = sphi %s485, %s485
        $region383: #{tpu_custom_call.1} parent=379 // loop_header_branch
          %511 = sbr.rel (%p509) target = $region387
        $region384: #{tpu_custom_call.1} parent=379 // loop_body
          %v515 = vld [vmem:[%s513] sm:%s506]
          %516 = vst [vmem:[%s514] sm:%s506] %v515
        $region385: #{tpu_custom_call.1} parent=379 // loop_footer
          %s512 = sadd.s32 1, %s508
        $region386: #{tpu_custom_call.1} parent=379 // loop_footer_branch
          %507 = sbr.rel target = $region382
        $region387: #{tpu_custom_call.1} parent=379 // loop_exit
          _
      $region380: #{tpu_custom_call.1} parent=364 // pred_fallthru
        _
    $region365: #{tpu_custom_call.1} parent=1 // pred_fallthru
      _
    // Predicated region
    $region366: #{tpu_custom_call.1} parent=1 // pred_check
      _
    $region367: #{tpu_custom_call.1} parent=1 // pred_check_branch
      %490 = sbr.rel (0) target = $region369
    $region368: #{tpu_custom_call.1} parent=1 // pred_region
      %s492 = ssub.s32 2, 1
      loop: start=0, step=1, limit=1
      $region370: #{tpu_custom_call.1} parent=368 // loop_pre_header
        _
      $region371: #{tpu_custom_call.1} parent=368 // loop_header
        %s494 = sphi 0, %s498
        %p495 = scmp.ge.s32.totalorder %s494, 1
        %s499 = sphi %s484, %s484
        %s500 = sphi %s485, %s485
      $region372: #{tpu_custom_call.1} parent=368 // loop_header_branch
        %497 = sbr.rel (%p495) target = $region376
      $region373: #{tpu_custom_call.1} parent=368 // loop_body
        %v501 = vld [vmem:[%s499] sm:%s492]
        %502 = vst [vmem:[%s500] sm:%s492] %v501
      $region374: #{tpu_custom_call.1} parent=368 // loop_footer
        %s498 = sadd.s32 1, %s494
      $region375: #{tpu_custom_call.1} parent=368 // loop_footer_branch
        %493 = sbr.rel target = $region371
      $region376: #{tpu_custom_call.1} parent=368 // loop_exit
        _
    $region369: #{tpu_custom_call.1} parent=1 // pred_fallthru
      _
    // Predicated region
    $region388: #{tpu_custom_call.1} parent=1 // pred_check
      _
    $region389: #{tpu_custom_call.1} parent=1 // pred_check_branch
      %519 = sbr.rel (0) target = $region391
    $region390: #{tpu_custom_call.1} parent=1 // pred_region
      %520 = vsyncadd %s486, 16
    $region391: #{tpu_custom_call.1} parent=1 // pred_fallthru
      _
    %s521 = sadd.s32 %s16, 13
    %s522 = sld [smem:[#allocation4 + %s521]]
    %s523 = scalar_lea.vmem %s1, %s522
    %s524 = scalar_lea.vmem [#allocation5], 13
    %s525 = scalar_lea.sflag [#allocation2], 13
    // Predicated region
    $region392: #{tpu_custom_call.1} parent=1 // pred_check
      _
    $region393: #{tpu_custom_call.1} parent=1 // pred_check_branch
      %527 = sbr.rel target = $region395
    $region394: #{tpu_custom_call.1} parent=1 // pred_region
      // Predicated region
      $region407: #{tpu_custom_call.1} parent=394 // pred_check
        _
      $region408: #{tpu_custom_call.1} parent=394 // pred_check_branch
        %543 = sbr.rel (0) target = $region410
      $region409: #{tpu_custom_call.1} parent=394 // pred_region
        %s545 = ssub.s32 2, 1
        loop: start=0, step=1, limit=1
        $region411: #{tpu_custom_call.1} parent=409 // loop_pre_header
          _
        $region412: #{tpu_custom_call.1} parent=409 // loop_header
          %s547 = sphi 0, %s551
          %p548 = scmp.ge.s32.totalorder %s547, 1
          %s552 = sphi %s523, %s523
          %s553 = sphi %s524, %s524
        $region413: #{tpu_custom_call.1} parent=409 // loop_header_branch
          %550 = sbr.rel (%p548) target = $region417
        $region414: #{tpu_custom_call.1} parent=409 // loop_body
          %v554 = vld [vmem:[%s552] sm:%s545]
          %555 = vst [vmem:[%s553] sm:%s545] %v554
        $region415: #{tpu_custom_call.1} parent=409 // loop_footer
          %s551 = sadd.s32 1, %s547
        $region416: #{tpu_custom_call.1} parent=409 // loop_footer_branch
          %546 = sbr.rel target = $region412
        $region417: #{tpu_custom_call.1} parent=409 // loop_exit
          _
      $region410: #{tpu_custom_call.1} parent=394 // pred_fallthru
        _
    $region395: #{tpu_custom_call.1} parent=1 // pred_fallthru
      _
    // Predicated region
    $region396: #{tpu_custom_call.1} parent=1 // pred_check
      _
    $region397: #{tpu_custom_call.1} parent=1 // pred_check_branch
      %529 = sbr.rel (0) target = $region399
    $region398: #{tpu_custom_call.1} parent=1 // pred_region
      %s531 = ssub.s32 2, 1
      loop: start=0, step=1, limit=1
      $region400: #{tpu_custom_call.1} parent=398 // loop_pre_header
        _
      $region401: #{tpu_custom_call.1} parent=398 // loop_header
        %s533 = sphi 0, %s537
        %p534 = scmp.ge.s32.totalorder %s533, 1
        %s538 = sphi %s523, %s523
        %s539 = sphi %s524, %s524
      $region402: #{tpu_custom_call.1} parent=398 // loop_header_branch
        %536 = sbr.rel (%p534) target = $region406
      $region403: #{tpu_custom_call.1} parent=398 // loop_body
        %v540 = vld [vmem:[%s538] sm:%s531]
        %541 = vst [vmem:[%s539] sm:%s531] %v540
      $region404: #{tpu_custom_call.1} parent=398 // loop_footer
        %s537 = sadd.s32 1, %s533
      $region405: #{tpu_custom_call.1} parent=398 // loop_footer_branch
        %532 = sbr.rel target = $region401
      $region406: #{tpu_custom_call.1} parent=398 // loop_exit
        _
    $region399: #{tpu_custom_call.1} parent=1 // pred_fallthru
      _
    // Predicated region
    $region418: #{tpu_custom_call.1} parent=1 // pred_check
      _
    $region419: #{tpu_custom_call.1} parent=1 // pred_check_branch
      %558 = sbr.rel (0) target = $region421
    $region420: #{tpu_custom_call.1} parent=1 // pred_region
      %559 = vsyncadd %s525, 16
    $region421: #{tpu_custom_call.1} parent=1 // pred_fallthru
      _
    %s560 = sadd.s32 %s16, 14
    %s561 = sld [smem:[#allocation4 + %s560]]
    %s562 = scalar_lea.vmem %s1, %s561
    %s563 = scalar_lea.vmem [#allocation5], 14
    %s564 = scalar_lea.sflag [#allocation2], 14
    // Predicated region
    $region422: #{tpu_custom_call.1} parent=1 // pred_check
      _
    $region423: #{tpu_custom_call.1} parent=1 // pred_check_branch
      %566 = sbr.rel target = $region425
    $region424: #{tpu_custom_call.1} parent=1 // pred_region
      // Predicated region
      $region437: #{tpu_custom_call.1} parent=424 // pred_check
        _
      $region438: #{tpu_custom_call.1} parent=424 // pred_check_branch
        %582 = sbr.rel (0) target = $region440
      $region439: #{tpu_custom_call.1} parent=424 // pred_region
        %s584 = ssub.s32 2, 1
        loop: start=0, step=1, limit=1
        $region441: #{tpu_custom_call.1} parent=439 // loop_pre_header
          _
        $region442: #{tpu_custom_call.1} parent=439 // loop_header
          %s586 = sphi 0, %s590
          %p587 = scmp.ge.s32.totalorder %s586, 1
          %s591 = sphi %s562, %s562
          %s592 = sphi %s563, %s563
        $region443: #{tpu_custom_call.1} parent=439 // loop_header_branch
          %589 = sbr.rel (%p587) target = $region447
        $region444: #{tpu_custom_call.1} parent=439 // loop_body
          %v593 = vld [vmem:[%s591] sm:%s584]
          %594 = vst [vmem:[%s592] sm:%s584] %v593
        $region445: #{tpu_custom_call.1} parent=439 // loop_footer
          %s590 = sadd.s32 1, %s586
        $region446: #{tpu_custom_call.1} parent=439 // loop_footer_branch
          %585 = sbr.rel target = $region442
        $region447: #{tpu_custom_call.1} parent=439 // loop_exit
          _
      $region440: #{tpu_custom_call.1} parent=424 // pred_fallthru
        _
    $region425: #{tpu_custom_call.1} parent=1 // pred_fallthru
      _
    // Predicated region
    $region426: #{tpu_custom_call.1} parent=1 // pred_check
      _
    $region427: #{tpu_custom_call.1} parent=1 // pred_check_branch
      %568 = sbr.rel (0) target = $region429
    $region428: #{tpu_custom_call.1} parent=1 // pred_region
      %s570 = ssub.s32 2, 1
      loop: start=0, step=1, limit=1
      $region430: #{tpu_custom_call.1} parent=428 // loop_pre_header
        _
      $region431: #{tpu_custom_call.1} parent=428 // loop_header
        %s572 = sphi 0, %s576
        %p573 = scmp.ge.s32.totalorder %s572, 1
        %s577 = sphi %s562, %s562
        %s578 = sphi %s563, %s563
      $region432: #{tpu_custom_call.1} parent=428 // loop_header_branch
        %575 = sbr.rel (%p573) target = $region436
      $region433: #{tpu_custom_call.1} parent=428 // loop_body
        %v579 = vld [vmem:[%s577] sm:%s570]
        %580 = vst [vmem:[%s578] sm:%s570] %v579
      $region434: #{tpu_custom_call.1} parent=428 // loop_footer
        %s576 = sadd.s32 1, %s572
      $region435: #{tpu_custom_call.1} parent=428 // loop_footer_branch
        %571 = sbr.rel target = $region431
      $region436: #{tpu_custom_call.1} parent=428 // loop_exit
        _
    $region429: #{tpu_custom_call.1} parent=1 // pred_fallthru
      _
    // Predicated region
    $region448: #{tpu_custom_call.1} parent=1 // pred_check
      _
    $region449: #{tpu_custom_call.1} parent=1 // pred_check_branch
      %597 = sbr.rel (0) target = $region451
    $region450: #{tpu_custom_call.1} parent=1 // pred_region
      %598 = vsyncadd %s564, 16
    $region451: #{tpu_custom_call.1} parent=1 // pred_fallthru
      _
    %s599 = sadd.s32 %s16, 15
    %s600 = sld [smem:[#allocation4 + %s599]]
    %s601 = scalar_lea.vmem %s1, %s600
    %s602 = scalar_lea.vmem [#allocation5], 15
    %s603 = scalar_lea.sflag [#allocation2], 15
    // Predicated region
    $region452: #{tpu_custom_call.1} parent=1 // pred_check
      _
    $region453: #{tpu_custom_call.1} parent=1 // pred_check_branch
      %605 = sbr.rel target = $region455
    $region454: #{tpu_custom_call.1} parent=1 // pred_region
      // Predicated region
      $region467: #{tpu_custom_call.1} parent=454 // pred_check
        _
      $region468: #{tpu_custom_call.1} parent=454 // pred_check_branch
        %621 = sbr.rel (0) target = $region470
      $region469: #{tpu_custom_call.1} parent=454 // pred_region
        %s623 = ssub.s32 2, 1
        loop: start=0, step=1, limit=1
        $region471: #{tpu_custom_call.1} parent=469 // loop_pre_header
          _
        $region472: #{tpu_custom_call.1} parent=469 // loop_header
          %s625 = sphi 0, %s629
          %p626 = scmp.ge.s32.totalorder %s625, 1
          %s630 = sphi %s601, %s601
          %s631 = sphi %s602, %s602
        $region473: #{tpu_custom_call.1} parent=469 // loop_header_branch
          %628 = sbr.rel (%p626) target = $region477
        $region474: #{tpu_custom_call.1} parent=469 // loop_body
          %v632 = vld [vmem:[%s630] sm:%s623]
          %633 = vst [vmem:[%s631] sm:%s623] %v632
        $region475: #{tpu_custom_call.1} parent=469 // loop_footer
          %s629 = sadd.s32 1, %s625
        $region476: #{tpu_custom_call.1} parent=469 // loop_footer_branch
          %624 = sbr.rel target = $region472
        $region477: #{tpu_custom_call.1} parent=469 // loop_exit
          _
      $region470: #{tpu_custom_call.1} parent=454 // pred_fallthru
        _
    $region455: #{tpu_custom_call.1} parent=1 // pred_fallthru
      _
    // Predicated region
    $region456: #{tpu_custom_call.1} parent=1 // pred_check
      _
    $region457: #{tpu_custom_call.1} parent=1 // pred_check_branch
      %607 = sbr.rel (0) target = $region459
    $region458: #{tpu_custom_call.1} parent=1 // pred_region
      %s609 = ssub.s32 2, 1
      loop: start=0, step=1, limit=1
      $region460: #{tpu_custom_call.1} parent=458 // loop_pre_header
        _
      $region461: #{tpu_custom_call.1} parent=458 // loop_header
        %s611 = sphi 0, %s615
        %p612 = scmp.ge.s32.totalorder %s611, 1
        %s616 = sphi %s601, %s601
        %s617 = sphi %s602, %s602
      $region462: #{tpu_custom_call.1} parent=458 // loop_header_branch
        %614 = sbr.rel (%p612) target = $region466
      $region463: #{tpu_custom_call.1} parent=458 // loop_body
        %v618 = vld [vmem:[%s616] sm:%s609]
        %619 = vst [vmem:[%s617] sm:%s609] %v618
      $region464: #{tpu_custom_call.1} parent=458 // loop_footer
        %s615 = sadd.s32 1, %s611
      $region465: #{tpu_custom_call.1} parent=458 // loop_footer_branch
        %610 = sbr.rel target = $region461
      $region466: #{tpu_custom_call.1} parent=458 // loop_exit
        _
    $region459: #{tpu_custom_call.1} parent=1 // pred_fallthru
      _
    // Predicated region
    $region478: #{tpu_custom_call.1} parent=1 // pred_check
      _
    $region479: #{tpu_custom_call.1} parent=1 // pred_check_branch
      %636 = sbr.rel (0) target = $region481
    $region480: #{tpu_custom_call.1} parent=1 // pred_region
      %637 = vsyncadd %s603, 16
    $region481: #{tpu_custom_call.1} parent=1 // pred_fallthru
      _
    loop: start=0, step=1, limit=16
    $region482: #{tpu_custom_call.1} parent=1 // loop_pre_header
      _
    $region483: #{tpu_custom_call.1} parent=1 // loop_header
      %s639 = sphi 0, %s643
      %p640 = scmp.ge.s32.totalorder %s639, 16
    $region484: #{tpu_custom_call.1} parent=1 // loop_header_branch
      %642 = sbr.rel (%p640) target = $region488
    $region485: #{tpu_custom_call.1} parent=1 // loop_body
      %s644 = sadd.s32 %s639, 16
      %p645 = scmp.lt.s32.totalorder %s644, 16
      // Predicated region
      $region489: #{tpu_custom_call.1} parent=485 // pred_check
        %p646 = pneg %p645
      $region490: #{tpu_custom_call.1} parent=485 // pred_check_branch
        %648 = sbr.rel (%p646) target = $region492
      $region491: #{tpu_custom_call.1} parent=485 // pred_region
        %s649 = sadd.s32 %s16, %s644
        %s650 = sld [smem:[#allocation4 + %s649]]
        %s651 = sand.u32 %s644, 15
        %s652 = scalar_lea.vmem %s1, %s650
        %s653 = scalar_lea.vmem [#allocation5], %s644
        %s654 = scalar_lea.sflag [#allocation2], %s651
        // Predicated region
        $region493: #{tpu_custom_call.1} parent=491 // pred_check
          _
        $region494: #{tpu_custom_call.1} parent=491 // pred_check_branch
          %656 = sbr.rel target = $region496
        $region495: #{tpu_custom_call.1} parent=491 // pred_region
          // Predicated region
          $region508: #{tpu_custom_call.1} parent=495 // pred_check
            _
          $region509: #{tpu_custom_call.1} parent=495 // pred_check_branch
            %672 = sbr.rel (0) target = $region511
          $region510: #{tpu_custom_call.1} parent=495 // pred_region
            %s674 = ssub.s32 2, 1
            loop: start=0, step=1, limit=1
            $region512: #{tpu_custom_call.1} parent=510 // loop_pre_header
              _
            $region513: #{tpu_custom_call.1} parent=510 // loop_header
              %s676 = sphi 0, %s680
              %p677 = scmp.ge.s32.totalorder %s676, 1
              %s681 = sphi %s652, %s652
              %s682 = sphi %s653, %s653
            $region514: #{tpu_custom_call.1} parent=510 // loop_header_branch
              %679 = sbr.rel (%p677) target = $region518
            $region515: #{tpu_custom_call.1} parent=510 // loop_body
              %v683 = vld [vmem:[%s681] sm:%s674]
              %684 = vst [vmem:[%s682] sm:%s674] %v683
            $region516: #{tpu_custom_call.1} parent=510 // loop_footer
              %s680 = sadd.s32 1, %s676
            $region517: #{tpu_custom_call.1} parent=510 // loop_footer_branch
              %675 = sbr.rel target = $region513
            $region518: #{tpu_custom_call.1} parent=510 // loop_exit
              _
          $region511: #{tpu_custom_call.1} parent=495 // pred_fallthru
            _
        $region496: #{tpu_custom_call.1} parent=491 // pred_fallthru
          _
        // Predicated region
        $region497: #{tpu_custom_call.1} parent=491 // pred_check
          _
        $region498: #{tpu_custom_call.1} parent=491 // pred_check_branch
          %658 = sbr.rel (0) target = $region500
        $region499: #{tpu_custom_call.1} parent=491 // pred_region
          %s660 = ssub.s32 2, 1
          loop: start=0, step=1, limit=1
          $region501: #{tpu_custom_call.1} parent=499 // loop_pre_header
            _
          $region502: #{tpu_custom_call.1} parent=499 // loop_header
            %s662 = sphi 0, %s666
            %p663 = scmp.ge.s32.totalorder %s662, 1
            %s667 = sphi %s652, %s652
            %s668 = sphi %s653, %s653
          $region503: #{tpu_custom_call.1} parent=499 // loop_header_branch
            %665 = sbr.rel (%p663) target = $region507
          $region504: #{tpu_custom_call.1} parent=499 // loop_body
            %v669 = vld [vmem:[%s667] sm:%s660]
            %670 = vst [vmem:[%s668] sm:%s660] %v669
          $region505: #{tpu_custom_call.1} parent=499 // loop_footer
            %s666 = sadd.s32 1, %s662
          $region506: #{tpu_custom_call.1} parent=499 // loop_footer_branch
            %661 = sbr.rel target = $region502
          $region507: #{tpu_custom_call.1} parent=499 // loop_exit
            _
        $region500: #{tpu_custom_call.1} parent=491 // pred_fallthru
          _
        // Predicated region
        $region519: #{tpu_custom_call.1} parent=491 // pred_check
          _
        $region520: #{tpu_custom_call.1} parent=491 // pred_check_branch
          %687 = sbr.rel (0) target = $region522
        $region521: #{tpu_custom_call.1} parent=491 // pred_region
          %688 = vsyncadd %s654, 16
        $region522: #{tpu_custom_call.1} parent=491 // pred_fallthru
          _
      $region492: #{tpu_custom_call.1} parent=485 // pred_fallthru
        _
      %s689 = sand.u32 %s639, 15
      %s690 = scalar_lea.sflag [#allocation2], %s689
      %692 = dma.done %s690, 16
    $region486: #{tpu_custom_call.1} parent=1 // loop_footer
      %s643 = sadd.s32 1, %s639
    $region487: #{tpu_custom_call.1} parent=1 // loop_footer_branch
      %638 = sbr.rel target = $region483
    $region488: #{tpu_custom_call.1} parent=1 // loop_exit
      _
    // Predicated region
    $region523: #{tpu_custom_call.1} parent=1 // pred_check
      _
    $region524: #{tpu_custom_call.1} parent=1 // pred_check_branch
      %694 = sbr.rel (0) target = $region526
    $region525: #{tpu_custom_call.1} parent=1 // pred_region
      %696 = vsyncadd [#allocation6], 0
      %s697 = sshll.u32 [#allocation5], 4
      %s698 = int_to_ptr.vmem [resolvable:$true] %s697
      %s699 = sshll.u32 %s2, 4
      %s700 = int_to_ptr.hbm [resolvable:$true] %s699
      %705 = dma.vmem_to_hbm [thread:$0]  %s698, 256, %s700, [#allocation6], 128, 128, 8
    $region526: #{tpu_custom_call.1} parent=1 // pred_fallthru
      _
    // Predicated region
    $region527: #{tpu_custom_call.1} parent=1 // pred_check
      _
    $region528: #{tpu_custom_call.1} parent=1 // pred_check_branch
      %707 = sbr.rel (0) target = $region530
    $region529: #{tpu_custom_call.1} parent=1 // pred_region
      %709 = dma.done [#allocation6], 256
    $region530: #{tpu_custom_call.1} parent=1 // pred_fallthru
      _
    %710 = vsyncpa [#allocation6], 1
  %711 = vsyncmov [#allocation2]
  %s712 = vpop.sfrf %711
  %p713 = scmp.eq.s32.totalorder %s712, 0
  %p714 = pneg %p713
  %716 = shalt.err (%p714)
  %s717 = scalar_lea.sflag [#allocation2], 1
  %718 = vsyncmov %s717
  %s719 = vpop.sfrf %718
  %p720 = scmp.eq.s32.totalorder %s719, 0
  %p721 = pneg %p720
  %723 = shalt.err (%p721)
  %s724 = scalar_lea.sflag [#allocation2], 2
  %725 = vsyncmov %s724
  %s726 = vpop.sfrf %725
  %p727 = scmp.eq.s32.totalorder %s726, 0
  %p728 = pneg %p727
  %730 = shalt.err (%p728)
  %s731 = scalar_lea.sflag [#allocation2], 3
  %732 = vsyncmov %s731
  %s733 = vpop.sfrf %732
  %p734 = scmp.eq.s32.totalorder %s733, 0
  %p735 = pneg %p734
  %737 = shalt.err (%p735)
  %s738 = scalar_lea.sflag [#allocation2], 4
  %739 = vsyncmov %s738
  %s740 = vpop.sfrf %739
  %p741 = scmp.eq.s32.totalorder %s740, 0
  %p742 = pneg %p741
  %744 = shalt.err (%p742)
  %s745 = scalar_lea.sflag [#allocation2], 5
  %746 = vsyncmov %s745
  %s747 = vpop.sfrf %746
  %p748 = scmp.eq.s32.totalorder %s747, 0
  %p749 = pneg %p748
  %751 = shalt.err (%p749)
  %s752 = scalar_lea.sflag [#allocation2], 6
  %753 = vsyncmov %s752
  %s754 = vpop.sfrf %753
  %p755 = scmp.eq.s32.totalorder %s754, 0
  %p756 = pneg %p755
  %758 = shalt.err (%p756)
  %s759 = scalar_lea.sflag [#allocation2], 7
  %760 = vsyncmov %s759
  %s761 = vpop.sfrf %760
  %p762 = scmp.eq.s32.totalorder %s761, 0
  %p763 = pneg %p762
  %765 = shalt.err (%p763)
  %s766 = scalar_lea.sflag [#allocation2], 8
  %767 = vsyncmov %s766
  %s768 = vpop.sfrf %767
  %p769 = scmp.eq.s32.totalorder %s768, 0
  %p770 = pneg %p769
  %772 = shalt.err (%p770)
  %s773 = scalar_lea.sflag [#allocation2], 9
  %774 = vsyncmov %s773
  %s775 = vpop.sfrf %774
  %p776 = scmp.eq.s32.totalorder %s775, 0
  %p777 = pneg %p776
  %779 = shalt.err (%p777)
  %s780 = scalar_lea.sflag [#allocation2], 10
  %781 = vsyncmov %s780
  %s782 = vpop.sfrf %781
  %p783 = scmp.eq.s32.totalorder %s782, 0
  %p784 = pneg %p783
  %786 = shalt.err (%p784)
  %s787 = scalar_lea.sflag [#allocation2], 11
  %788 = vsyncmov %s787
  %s789 = vpop.sfrf %788
  %p790 = scmp.eq.s32.totalorder %s789, 0
  %p791 = pneg %p790
  %793 = shalt.err (%p791)
  %s794 = scalar_lea.sflag [#allocation2], 12
  %795 = vsyncmov %s794
  %s796 = vpop.sfrf %795
  %p797 = scmp.eq.s32.totalorder %s796, 0
  %p798 = pneg %p797
  %800 = shalt.err (%p798)
  %s801 = scalar_lea.sflag [#allocation2], 13
  %802 = vsyncmov %s801
  %s803 = vpop.sfrf %802
  %p804 = scmp.eq.s32.totalorder %s803, 0
  %p805 = pneg %p804
  %807 = shalt.err (%p805)
  %s808 = scalar_lea.sflag [#allocation2], 14
  %809 = vsyncmov %s808
  %s810 = vpop.sfrf %809
  %p811 = scmp.eq.s32.totalorder %s810, 0
  %p812 = pneg %p811
  %814 = shalt.err (%p812)
  %s815 = scalar_lea.sflag [#allocation2], 15
  %816 = vsyncmov %s815
  %s817 = vpop.sfrf %816
  %p818 = scmp.eq.s32.totalorder %s817, 0
  %p819 = pneg %p818
  %821 = shalt.err (%p819)

</llo_original>
